<compile_context>
chip_gen: v5e
topology: v5e:2x2
jax: 0.10.0
libtpu: 0.0.40
codegen_flags: <defaults>
</compile_context>

<pallas_src>
import functools

import jax
import jax.numpy as jnp
import numpy as np
from jax import lax
from jax.experimental import pallas as pl
from jax.experimental.pallas import tpu as pltpu


def _pool_kernel(qv_ref, qi_ref, va_ref, fa_ref, out_ref, *, neighbor_num, unroll):
    # qv_ref : (1, PT, 3)  f32   sampled (query) vertices
    # qi_ref : (PT, 1)     i32   global vertex index of each query (self-exclusion)
    # va_ref : (1, 3, V)   f32   all vertices, channels-first (V on lanes)
    # fa_ref : (1, V, C)   f32   all features
    # out_ref: (1, PT, C)  f32   max-pooled features at the sampled vertices
    pt = qv_ref.shape[1]
    v = va_ref.shape[2]
    c = fa_ref.shape[2]

    qv = qv_ref[0]          # (PT, 3)
    qi = qi_ref[...]        # (PT, 1) int32
    va = va_ref[0]          # (3, V)
    fa = fa_ref[0]          # (V, C)

    # Squared distance from every query to every vertex, one coordinate at a
    # time (pure VPU, lane dense over V).
    dist = jnp.zeros((pt, v), dtype=jnp.float32)
    for d in range(3):
        diff = qv[:, d:d + 1] - va[d:d + 1, :]            # (PT,1)-(1,V) -> (PT,V)
        dist = dist + diff * diff

    col_i = lax.broadcasted_iota(jnp.int32, (pt, v), 1)   # global column index (int32 only)

    # Exclude the query vertex itself.
    # TODO(synk): the reference drops the *first* of the top-(k+1) hits; if a
    # distinct vertex coincides exactly with the query this can differ — edge
    # case only (assumes no duplicate points).
    dist = jnp.where(col_i == qi, jnp.inf, dist)

    pooled0 = jnp.full((pt, c), -jnp.inf, dtype=jnp.float32)

    def select_one(_, carry):
        dist, pooled = carry
        rowmin = jnp.min(dist, axis=1, keepdims=True)                   # (PT,1)
        is_min = dist == rowmin
        # Lowest-index tie-break, entirely in int32 (no f32 index plane).
        amin = jnp.min(jnp.where(is_min, col_i, v), axis=1, keepdims=True)
        sel = col_i == amin                                             # exactly one col per row
        onehot = sel.astype(jnp.float32)                                # (PT, V)
        gathered = jnp.dot(onehot, fa,
                           preferred_element_type=jnp.float32)          # (PT, C): exact row gather
        pooled = jnp.maximum(pooled, gathered)
        dist = jnp.where(sel, jnp.inf, dist)                            # knock out chosen neighbor
        return dist, pooled

    _, pooled = lax.fori_loop(0, neighbor_num, select_one, (dist, pooled0),
                              unroll=unroll)
    out_ref[0] = pooled.astype(out_ref.dtype)


def _pick_query_tile(p, v, bs):
    """Largest power-of-two divisor of p such that a (PT, V) f32 plane stays
    ~<=1 MiB, with >=2 grid steps guaranteed when bs == 1 (v7x megacore)."""
    budget_rows = max(8, (1 << 20) // (4 * v))
    smallest_div = None
    for t in (256, 128, 64, 32, 16, 8):
        if p % t:
            continue
        if bs == 1 and p // t < 2 and p > 8:
            continue                       # keep both v7x TensorCores busy
        smallest_div = t
        if t <= budget_rows:
            return t
    if smallest_div is not None:
        return smallest_div
    return p                               # block == full array dim is always legal


def knn_max_pool(vertices, feature_map, q_vertices, q_index, neighbor_num):
    """Max over the `neighbor_num` nearest (non-self) neighbors' features,
    evaluated only at the sampled query vertices."""
    bs, v, _ = vertices.shape
    c = feature_map.shape[-1]
    p = q_vertices.shape[1]
    assert 1 <= neighbor_num <= v - 1, "require neighbor_num < vertice_num"

    p_tile = _pick_query_tile(p, v, bs)
    assert p % p_tile == 0

    vertices_cf = jnp.transpose(vertices, (0, 2, 1))          # (bs, 3, V) lane-dense on V
    qi = q_index.reshape(p, 1).astype(jnp.int32)              # (P, 1), PT on sublanes

    kern = functools.partial(_pool_kernel, neighbor_num=neighbor_num,
                             unroll=bool(neighbor_num <= 8))

    # --- VMEM budget derived from actual block sizes (single-buffered fa/va). ---
    fa_bytes = v * c * 4
    va_bytes = 3 * v * 4
    qv_bytes = p_tile * 3 * 4
    qi_bytes = p_tile * 4
    out_bytes = p_tile * c * 4
    interm = 3 * p_tile * v * 4 + 2 * p_tile * c * 4          # dist/sel/col_i + pooled/gathered
    need = fa_bytes + va_bytes + 2 * (qv_bytes + qi_bytes + out_bytes) + 4 * interm + (8 << 20)
    try:
        phys_vmem = pltpu.get_tpu_info().vmem_capacity_bytes
    except Exception:
        phys_vmem = 64 << 20                                   # conservative (v7x per-TC)
    vmem_limit = int(min(max(need, 16 << 20), int(phys_vmem * 0.75)))

    cost = pl.CostEstimate(
        flops=2 * neighbor_num * bs * p * v * c + 9 * bs * p * v,
        transcendentals=0,
        bytes_accessed=bs * (v * c + 3 * v + 3 * p + p * c) * 4 + p * 4,
    )

    return pl.pallas_call(
        kern,
        out_shape=jax.ShapeDtypeStruct((bs, p, c), jnp.float32),
        grid_spec=pltpu.PrefetchScalarGridSpec(
            num_scalar_prefetch=0,
            grid=(bs, p // p_tile),
            in_specs=[
                pl.BlockSpec((1, p_tile, 3), lambda b, t: (b, t, 0)),   # query vertices
                pl.BlockSpec((p_tile, 1), lambda b, t: (t, 0)),         # query global indices
                # Grid-invariant along the query-tile axis -> single buffer.
                pl.BlockSpec((1, 3, v), lambda b, t: (b, 0, 0),
                             pipeline_mode=pl.Buffered(buffer_count=1)),
                pl.BlockSpec((1, v, c), lambda b, t: (b, 0, 0),
                             pipeline_mode=pl.Buffered(buffer_count=1)),
            ],
            out_specs=pl.BlockSpec((1, p_tile, c), lambda b, t: (b, t, 0)),
        ),
        compiler_params=pltpu.CompilerParams(
            dimension_semantics=("parallel", "parallel"),
            vmem_limit_bytes=vmem_limit,
        ),
        cost_estimate=cost,
    )(q_vertices, qi, vertices_cf, feature_map)


def pool_layer_forward(vertices, feature_map, sample_idx, neighbor_num=4):
    """Pallas-backed Pool_layer.forward.

    sample_idx plays the role of torch.randperm(V)[:V//pooling_rate]; it is
    produced in the caller (host-level RNG, data independent).
    """
    vertices_pool = jnp.take(vertices, sample_idx, axis=1)              # (bs, P, 3)
    feature_map_pool = knn_max_pool(vertices, feature_map,
                                    vertices_pool, sample_idx, neighbor_num)
    return vertices_pool, feature_map_pool


def pool_layer_reference(vertices, feature_map, sample_idx, neighbor_num):
    """Pure-JAX reference mirroring the PyTorch forward (full pooled map, then subsample)."""
    bs, v, _ = vertices.shape
    dist = jnp.zeros((bs, v, v), dtype=jnp.float32)
    for d in range(3):
        dd = vertices[:, :, None, d] - vertices[:, None, :, d]
        dist = dist + dd * dd
    _, nbr = lax.top_k(-dist, neighbor_num + 1)       # N+1 smallest (self first, dist==0)
    nbr = nbr[:, :, 1:]                               # drop self
    b_idx = jnp.arange(bs)[:, None, None]
    neighbor_feature = feature_map[b_idx, nbr]        # (bs, V, N, C)
    pooled = jnp.max(neighbor_feature, axis=2)        # (bs, V, C)
    return vertices[:, sample_idx, :], pooled[:, sample_idx, :]


if __name__ == "__main__":
    pooling_rate = 4
    neighbor_num = 4
    bs, vertice_num, channel_num = 2, 256, 128

    key = jax.random.PRNGKey(0)
    k_vert, k_feat, k_perm = jax.random.split(key, 3)

    vertices = jax.random.normal(k_vert, (bs, vertice_num, 3), dtype=jnp.float32)
    feature_map = jax.random.normal(k_feat, (bs, vertice_num, channel_num),
                                    dtype=jnp.float32)

    pool_num = vertice_num // pooling_rate
    # TODO(synk): torch.randperm's exact RNG stream is not reproduced; a uniform
    # random subsample via jax.random.permutation keeps the module semantics.
    sample_idx = jax.random.permutation(k_perm, vertice_num)[:pool_num].astype(jnp.int32)

    v_pool, f_pool = pool_layer_forward(vertices, feature_map, sample_idx,
                                        neighbor_num=neighbor_num)
    v_pool, f_pool = jax.block_until_ready((v_pool, f_pool))

    v_ref, f_ref = pool_layer_reference(vertices, feature_map, sample_idx,
                                        neighbor_num)
    v_ref, f_ref = jax.block_until_ready((v_ref, f_ref))

    assert v_pool.shape == (bs, pool_num, 3)
    assert f_pool.shape == (bs, pool_num, channel_num)
    np.testing.assert_allclose(np.asarray(v_pool), np.asarray(v_ref),
                               rtol=0, atol=0)
    np.testing.assert_allclose(np.asarray(f_pool), np.asarray(f_ref),
                               rtol=1e-6, atol=1e-6)
    print("KERNEL_OK")
</pallas_src>

<mosaic_0001>
module attributes {stable_mosaic.version = 11 : i64} {
  func.func @_pool_kernel(%arg0: i32, %arg1: i32, %arg2: memref<1x64x3xf32, #tpu.memory_space<vmem>>, %arg3: memref<64x1xi32, #tpu.memory_space<vmem>>, %arg4: memref<1x3x256xf32, #tpu.memory_space<vmem>>, %arg5: memref<1x256x128xf32, #tpu.memory_space<vmem>>, %arg6: memref<1x64x128xf32, #tpu.memory_space<vmem>>) attributes {dimension_semantics = [#tpu.dimension_semantics<parallel>, #tpu.dimension_semantics<parallel>], iteration_bounds = array<i64: 2, 1>, scalar_prefetch = 0 : i64, scratch_operands = 0 : i64, tpu.core_type = #tpu.core_type<tc>, window_params = [{transform_indices = @transform_0, window_bounds = array<i64: 1, 64, 3>}, {transform_indices = @transform_1, window_bounds = array<i64: 64, 1>}, {pipeline_mode = #tpu.pipeline_mode<synchronous>, transform_indices = @transform_2, window_bounds = array<i64: 1, 3, 256>}, {pipeline_mode = #tpu.pipeline_mode<synchronous>, transform_indices = @transform_3, window_bounds = array<i64: 1, 256, 128>}, {transform_indices = @transform_4, window_bounds = array<i64: 1, 64, 128>}]} {
    %c0 = arith.constant 0 : index
    %c0_0 = arith.constant 0 : index
    %c0_1 = arith.constant 0 : index
    %0 = vector.load %arg2[%c0, %c0_0, %c0_1] : memref<1x64x3xf32, #tpu.memory_space<vmem>>, vector<1x64x3xf32>
    %1 = vector.shape_cast %0 : vector<1x64x3xf32> to vector<64x3xf32>
    %c0_2 = arith.constant 0 : index
    %c0_3 = arith.constant 0 : index
    %2 = vector.load %arg3[%c0_2, %c0_3] : memref<64x1xi32, #tpu.memory_space<vmem>>, vector<64x1xi32>
    %c0_4 = arith.constant 0 : index
    %c0_5 = arith.constant 0 : index
    %c0_6 = arith.constant 0 : index
    %3 = vector.load %arg4[%c0_4, %c0_5, %c0_6] : memref<1x3x256xf32, #tpu.memory_space<vmem>>, vector<1x3x256xf32>
    %4 = vector.shape_cast %3 : vector<1x3x256xf32> to vector<3x256xf32>
    %c0_7 = arith.constant 0 : index
    %c0_8 = arith.constant 0 : index
    %c0_9 = arith.constant 0 : index
    %5 = vector.load %arg5[%c0_7, %c0_8, %c0_9] : memref<1x256x128xf32, #tpu.memory_space<vmem>>, vector<1x256x128xf32>
    %6 = vector.shape_cast %5 : vector<1x256x128xf32> to vector<256x128xf32>
    %cst = arith.constant 0.000000e+00 : f32
    %7 = vector.broadcast %cst : f32 to vector<64x256xf32>
    %8 = vector.extract_strided_slice %1 {offsets = [0, 0], sizes = [64, 1], strides = [1, 1]} : vector<64x3xf32> to vector<64x1xf32>
    %9 = vector.extract_strided_slice %4 {offsets = [0, 0], sizes = [1, 256], strides = [1, 1]} : vector<3x256xf32> to vector<1x256xf32>
    %10 = vector.broadcast %8 : vector<64x1xf32> to vector<64x256xf32>
    %11 = vector.broadcast %9 : vector<1x256xf32> to vector<64x256xf32>
    %12 = arith.subf %10, %11 : vector<64x256xf32>
    %13 = arith.mulf %12, %12 : vector<64x256xf32>
    %14 = arith.addf %7, %13 : vector<64x256xf32>
    %15 = vector.extract_strided_slice %1 {offsets = [0, 1], sizes = [64, 1], strides = [1, 1]} : vector<64x3xf32> to vector<64x1xf32>
    %16 = vector.extract_strided_slice %4 {offsets = [1, 0], sizes = [1, 256], strides = [1, 1]} : vector<3x256xf32> to vector<1x256xf32>
    %17 = vector.broadcast %15 : vector<64x1xf32> to vector<64x256xf32>
    %18 = vector.broadcast %16 : vector<1x256xf32> to vector<64x256xf32>
    %19 = arith.subf %17, %18 : vector<64x256xf32>
    %20 = arith.mulf %19, %19 : vector<64x256xf32>
    %21 = arith.addf %14, %20 : vector<64x256xf32>
    %22 = vector.extract_strided_slice %1 {offsets = [0, 2], sizes = [64, 1], strides = [1, 1]} : vector<64x3xf32> to vector<64x1xf32>
    %23 = vector.extract_strided_slice %4 {offsets = [2, 0], sizes = [1, 256], strides = [1, 1]} : vector<3x256xf32> to vector<1x256xf32>
    %24 = vector.broadcast %22 : vector<64x1xf32> to vector<64x256xf32>
    %25 = vector.broadcast %23 : vector<1x256xf32> to vector<64x256xf32>
    %26 = arith.subf %24, %25 : vector<64x256xf32>
    %27 = arith.mulf %26, %26 : vector<64x256xf32>
    %28 = arith.addf %21, %27 : vector<64x256xf32>
    %29 = tpu.iota {dimensions = array<i32: 1>} : vector<64x256xi32>
    %30 = vector.broadcast %2 : vector<64x1xi32> to vector<64x256xi32>
    %31 = arith.cmpi eq, %29, %30 : vector<64x256xi32>
    %cst_10 = arith.constant 0x7F800000 : f32
    %32 = vector.broadcast %cst_10 : f32 to vector<64x256xf32>
    %33 = arith.select %31, %32, %28 : vector<64x256xi1>, vector<64x256xf32>
    %cst_11 = arith.constant 0xFF800000 : f32
    %34 = vector.broadcast %cst_11 : f32 to vector<64x128xf32>
    %c0_i32 = arith.constant 0 : i32
    %cst_12 = arith.constant dense<0x7F800000> : vector<64xf32>
    %35 = vector.multi_reduction <minimumf>, %33, %cst_12 [1] : vector<64x256xf32> to vector<64xf32>
    %36 = vector.shape_cast %35 : vector<64xf32> to vector<64x1xf32>
    %37 = vector.broadcast %36 : vector<64x1xf32> to vector<64x256xf32>
    %38 = arith.cmpf oeq, %33, %37 : vector<64x256xf32>
    %c256_i32 = arith.constant 256 : i32
    %39 = vector.broadcast %c256_i32 : i32 to vector<64x256xi32>
    %40 = arith.select %38, %29, %39 : vector<64x256xi1>, vector<64x256xi32>
    %cst_13 = arith.constant dense<2147483647> : vector<64xi32>
    %41 = vector.multi_reduction <minsi>, %40, %cst_13 [1] : vector<64x256xi32> to vector<64xi32>
    %42 = vector.shape_cast %41 : vector<64xi32> to vector<64x1xi32>
    %43 = vector.broadcast %42 : vector<64x1xi32> to vector<64x256xi32>
    %44 = arith.cmpi eq, %29, %43 : vector<64x256xi32>
    %45 = arith.extui %44 : vector<64x256xi1> to vector<64x256xi32>
    %46 = arith.sitofp %45 : vector<64x256xi32> to vector<64x256xf32>
    %cst_14 = arith.constant dense<0.000000e+00> : vector<64x128xf32>
    %47 = tpu.matmul %46, %6, %cst_14 {dimension_numbers = #tpu.dot_dimension_numbers<[1], [0], [0], [1], [0, 0, 1, 1], [], []>} : vector<64x256xf32>, vector<256x128xf32>, vector<64x128xf32> -> vector<64x128xf32>
    %48 = arith.maximumf %34, %47 : vector<64x128xf32>
    %cst_15 = arith.constant 0x7F800000 : f32
    %49 = vector.broadcast %cst_15 : f32 to vector<64x256xf32>
    %50 = arith.select %44, %49, %33 : vector<64x256xi1>, vector<64x256xf32>
    %c1_i32 = arith.constant 1 : i32
    %cst_16 = arith.constant dense<0x7F800000> : vector<64xf32>
    %51 = vector.multi_reduction <minimumf>, %50, %cst_16 [1] : vector<64x256xf32> to vector<64xf32>
    %52 = vector.shape_cast %51 : vector<64xf32> to vector<64x1xf32>
    %53 = vector.broadcast %52 : vector<64x1xf32> to vector<64x256xf32>
    %54 = arith.cmpf oeq, %50, %53 : vector<64x256xf32>
    %c256_i32_17 = arith.constant 256 : i32
    %55 = vector.broadcast %c256_i32_17 : i32 to vector<64x256xi32>
    %56 = arith.select %54, %29, %55 : vector<64x256xi1>, vector<64x256xi32>
    %cst_18 = arith.constant dense<2147483647> : vector<64xi32>
    %57 = vector.multi_reduction <minsi>, %56, %cst_18 [1] : vector<64x256xi32> to vector<64xi32>
    %58 = vector.shape_cast %57 : vector<64xi32> to vector<64x1xi32>
    %59 = vector.broadcast %58 : vector<64x1xi32> to vector<64x256xi32>
    %60 = arith.cmpi eq, %29, %59 : vector<64x256xi32>
    %61 = arith.extui %60 : vector<64x256xi1> to vector<64x256xi32>
    %62 = arith.sitofp %61 : vector<64x256xi32> to vector<64x256xf32>
    %cst_19 = arith.constant dense<0.000000e+00> : vector<64x128xf32>
    %63 = tpu.matmul %62, %6, %cst_19 {dimension_numbers = #tpu.dot_dimension_numbers<[1], [0], [0], [1], [0, 0, 1, 1], [], []>} : vector<64x256xf32>, vector<256x128xf32>, vector<64x128xf32> -> vector<64x128xf32>
    %64 = arith.maximumf %48, %63 : vector<64x128xf32>
    %cst_20 = arith.constant 0x7F800000 : f32
    %65 = vector.broadcast %cst_20 : f32 to vector<64x256xf32>
    %66 = arith.select %60, %65, %50 : vector<64x256xi1>, vector<64x256xf32>
    %c2_i32 = arith.constant 2 : i32
    %cst_21 = arith.constant dense<0x7F800000> : vector<64xf32>
    %67 = vector.multi_reduction <minimumf>, %66, %cst_21 [1] : vector<64x256xf32> to vector<64xf32>
    %68 = vector.shape_cast %67 : vector<64xf32> to vector<64x1xf32>
    %69 = vector.broadcast %68 : vector<64x1xf32> to vector<64x256xf32>
    %70 = arith.cmpf oeq, %66, %69 : vector<64x256xf32>
    %c256_i32_22 = arith.constant 256 : i32
    %71 = vector.broadcast %c256_i32_22 : i32 to vector<64x256xi32>
    %72 = arith.select %70, %29, %71 : vector<64x256xi1>, vector<64x256xi32>
    %cst_23 = arith.constant dense<2147483647> : vector<64xi32>
    %73 = vector.multi_reduction <minsi>, %72, %cst_23 [1] : vector<64x256xi32> to vector<64xi32>
    %74 = vector.shape_cast %73 : vector<64xi32> to vector<64x1xi32>
    %75 = vector.broadcast %74 : vector<64x1xi32> to vector<64x256xi32>
    %76 = arith.cmpi eq, %29, %75 : vector<64x256xi32>
    %77 = arith.extui %76 : vector<64x256xi1> to vector<64x256xi32>
    %78 = arith.sitofp %77 : vector<64x256xi32> to vector<64x256xf32>
    %cst_24 = arith.constant dense<0.000000e+00> : vector<64x128xf32>
    %79 = tpu.matmul %78, %6, %cst_24 {dimension_numbers = #tpu.dot_dimension_numbers<[1], [0], [0], [1], [0, 0, 1, 1], [], []>} : vector<64x256xf32>, vector<256x128xf32>, vector<64x128xf32> -> vector<64x128xf32>
    %80 = arith.maximumf %64, %79 : vector<64x128xf32>
    %cst_25 = arith.constant 0x7F800000 : f32
    %81 = vector.broadcast %cst_25 : f32 to vector<64x256xf32>
    %82 = arith.select %76, %81, %66 : vector<64x256xi1>, vector<64x256xf32>
    %c3_i32 = arith.constant 3 : i32
    %cst_26 = arith.constant dense<0x7F800000> : vector<64xf32>
    %83 = vector.multi_reduction <minimumf>, %82, %cst_26 [1] : vector<64x256xf32> to vector<64xf32>
    %84 = vector.shape_cast %83 : vector<64xf32> to vector<64x1xf32>
    %85 = vector.broadcast %84 : vector<64x1xf32> to vector<64x256xf32>
    %86 = arith.cmpf oeq, %82, %85 : vector<64x256xf32>
    %c256_i32_27 = arith.constant 256 : i32
    %87 = vector.broadcast %c256_i32_27 : i32 to vector<64x256xi32>
    %88 = arith.select %86, %29, %87 : vector<64x256xi1>, vector<64x256xi32>
    %cst_28 = arith.constant dense<2147483647> : vector<64xi32>
    %89 = vector.multi_reduction <minsi>, %88, %cst_28 [1] : vector<64x256xi32> to vector<64xi32>
    %90 = vector.shape_cast %89 : vector<64xi32> to vector<64x1xi32>
    %91 = vector.broadcast %90 : vector<64x1xi32> to vector<64x256xi32>
    %92 = arith.cmpi eq, %29, %91 : vector<64x256xi32>
    %93 = arith.extui %92 : vector<64x256xi1> to vector<64x256xi32>
    %94 = arith.sitofp %93 : vector<64x256xi32> to vector<64x256xf32>
    %cst_29 = arith.constant dense<0.000000e+00> : vector<64x128xf32>
    %95 = tpu.matmul %94, %6, %cst_29 {dimension_numbers = #tpu.dot_dimension_numbers<[1], [0], [0], [1], [0, 0, 1, 1], [], []>} : vector<64x256xf32>, vector<256x128xf32>, vector<64x128xf32> -> vector<64x128xf32>
    %96 = arith.maximumf %80, %95 : vector<64x128xf32>
    %cst_30 = arith.constant 0x7F800000 : f32
    %97 = vector.broadcast %cst_30 : f32 to vector<64x256xf32>
    %98 = arith.select %92, %97, %82 : vector<64x256xi1>, vector<64x256xf32>
    %c0_31 = arith.constant 0 : index
    %c0_32 = arith.constant 0 : index
    %c0_33 = arith.constant 0 : index
    %99 = vector.load %arg6[%c0_31, %c0_32, %c0_33] : memref<1x64x128xf32, #tpu.memory_space<vmem>>, vector<1x64x128xf32>
    %100 = vector.shape_cast %99 : vector<1x64x128xf32> to vector<64x128xf32>
    %101 = vector.shape_cast %96 : vector<64x128xf32> to vector<1x64x128xf32>
    tpu.vector_store %arg6[%c0_31, %c0_32, %c0_33], %101 {strides = array<i32>} : memref<1x64x128xf32, #tpu.memory_space<vmem>>, vector<1x64x128xf32>,
    return
  }
  func.func @transform_0(%arg0: i32, %arg1: i32) -> (i32, i32, i32) {
    %c0_i32 = arith.constant 0 : i32
    %c0_i32_0 = arith.constant 0 : i32
    return %arg0, %arg1, %c0_i32 : i32, i32, i32
  }
  func.func @transform_1(%arg0: i32, %arg1: i32) -> (i32, i32) {
    %c0_i32 = arith.constant 0 : i32
    %c0_i32_0 = arith.constant 0 : i32
    return %arg1, %c0_i32 : i32, i32
  }
  func.func @transform_2(%arg0: i32, %arg1: i32) -> (i32, i32, i32) {
    %c0_i32 = arith.constant 0 : i32
    %c0_i32_0 = arith.constant 0 : i32
    %c0_i32_1 = arith.constant 0 : i32
    return %arg0, %c0_i32, %c0_i32_0 : i32, i32, i32
  }
  func.func @transform_3(%arg0: i32, %arg1: i32) -> (i32, i32, i32) {
    %c0_i32 = arith.constant 0 : i32
    %c0_i32_0 = arith.constant 0 : i32
    %c0_i32_1 = arith.constant 0 : i32
    return %arg0, %c0_i32, %c0_i32_0 : i32, i32, i32
  }
  func.func @transform_4(%arg0: i32, %arg1: i32) -> (i32, i32, i32) {
    %c0_i32 = arith.constant 0 : i32
    %c0_i32_0 = arith.constant 0 : i32
    return %arg0, %arg1, %c0_i32 : i32, i32, i32
  }
}

</mosaic_0001>

<llo_original>
// kernel: tpu_custom_call.1
$region0: #{tpu_custom_call.1}
  #allocation0 [shape = 'u32[]', space=smem, size = 0x4, offset = 0x4, fixed_abs, tag = 'smem constant byte address 0x4 - core index']
  #allocation1 [shape = 'u32[72,128]{1,0:T(1,128)}', space=vmem, size = 0x9000, scoped, tag = 'internal scratch']
  %s0 = inlined_call_operand.vmem [shape: f32[2,64,3], index: 0, kind: input, shape index: {}]
  %s1 = inlined_call_operand.vmem [shape: s32[64,1], index: 1, kind: input, shape index: {}]
  %s2 = inlined_call_operand.vmem [shape: f32[2,3,256], index: 2, kind: input, shape index: {}]
  %s3 = inlined_call_operand.hbm [shape: f32[2,256,128], index: 3, kind: input, shape index: {}]
  %s4 = inlined_call_operand.hbm [shape: f32[2,64,128], index: 4, kind: output, shape index: {}]
  %s5 = sld [smem:[#allocation0]]
  $region53: #{tpu_custom_call.1} parent=0
    _
  %s7 = ssub.s32 1, %s5
  %s8 = scalar_select 0, %s7, %s5
  $region1: #{tpu_custom_call.1} parent=0
    #allocation2 [shape = 'u8[131072]{0}', space=vmem, size = 0x20000, scoped, tag = 'input window, operand 3, single buffered']
    #allocation3 [shape = 's32[2]{0}', space=sflag, size = 0x8, scoped, tag = 'scoped memory for tpu_custom_call.1']
    #allocation4 [shape = 's32[2]{0}', space=sflag, size = 0x8, scoped, tag = 'scoped memory for tpu_custom_call.1']
    #allocation5 [shape = 'u8[65536]{0}', space=vmem, size = 0x10000, scoped, tag = 'output window, operand 0']
    %9 = vsyncpa [#allocation3], 0
    %10 = vsyncpa [#allocation4], 0
    %s11 = scalar_lea.sflag [#allocation4], 1
    %12 = vsyncpa %s11, 0
    loop: start=0, step=1, limit=4
    $region2: #{tpu_custom_call.1} parent=1 // loop_pre_header
      _
    $region3: #{tpu_custom_call.1} parent=1 // loop_header
      %s14 = sphi 0, %s18
      %p15 = scmp.ge.s32.totalorder %s14, 4
      %s21 = sphi 0, %s33
      %s22 = sphi 0, %s29
      %s23 = sphi 0, %s21
      %s24 = sphi 0, %s22
      %s25 = sphi 0, %s23
      %s26 = sphi 0, %s24
      %s38 = sphi 0, %s40
      %s41 = sphi 0, %s38
      %s42 = sphi 0, %s41
      %s58 = sphi 0, %s42
      %s64 = sphi 0, %s66
      %s67 = sphi 0, %s64
      %s68 = sphi 0, %s67
      %s84 = sphi 0, %s68
      %s90 = sphi 0, %s92
      %s93 = sphi 0, %s90
      %s94 = sphi 0, %s93
      %s110 = sphi 0, %s94
      %s116 = sphi 0, %s118
      %s119 = sphi 0, %s116
      %s120 = sphi 0, %s119
      %s136 = sphi 0, %s120
      %s144 = sphi 0, %s146
      %s147 = sphi 0, %s144
      %s148 = sphi 0, %s147
      %s164 = sphi 0, %s148
    $region4: #{tpu_custom_call.1} parent=1 // loop_header_branch
      %17 = sbr.rel (%p15) target = $region8
    $region5: #{tpu_custom_call.1} parent=1 // loop_body
      %s19 = ssub.s32 %s14, 1
      %s20 = ssub.s32 %s14, 2
      %s27 = sadd.s32 1, %s22
      %p28 = scmp.ge.s32.totalorder %s27, 1
      %s29 = scalar_select %p28, 0, %s27
      %s30 = sadd.s32 1, %s21
      %s31 = scalar_select %p28, %s30, %s21
      %p32 = scmp.ge.s32.totalorder %s31, 2
      %s33 = scalar_select %p32, 0, %s31
      %s34 = ssub.s32 %s21, %s33
      %s35 = ssub.s32 %s22, %s29
      %s36 = sor.u32 %s34, %s35
      %p37 = scmp.eq.s32.totalorder %s36, 0
      %s39 = sadd.s32 %s38, 1
      %s40 = scalar_select %p37, %s38, %s39
      %p43 = pneg %p37
      %p44 = scmp.eq.s32.totalorder %s14, 1
      %p45 = por %p43, %p44
      %p46 = scmp.ne.s32.totalorder %s38, %s41
      %p47 = scmp.eq.s32.totalorder %s14, 0
      %p48 = por %p46, %p47
      %p49 = scmp.ne.s32.totalorder %s38, %s41
      %p50 = scmp.eq.s32.totalorder %s19, 1
      %p51 = por %p49, %p50
      %p52 = scmp.ne.s32.totalorder %s41, %s42
      %p53 = scmp.eq.s32.totalorder %s19, 0
      %p54 = por %p52, %p53
      %p55 = scmp.ne.s32.totalorder %s41, %s42
      %p56 = scmp.eq.s32.totalorder %s20, 1
      %p57 = por %p55, %p56
      %p59 = scmp.ne.s32.totalorder %s42, %s58
      %p60 = scmp.eq.s32.totalorder %s20, 0
      %p61 = por %p59, %p60
      %s62 = ssub.s32 %s22, %s29
      %p63 = scmp.eq.s32.totalorder %s62, 0
      %s65 = sadd.s32 %s64, 1
      %s66 = scalar_select %p63, %s64, %s65
      %p69 = pneg %p63
      %p70 = scmp.eq.s32.totalorder %s14, 1
      %p71 = por %p69, %p70
      %p72 = scmp.ne.s32.totalorder %s64, %s67
      %p73 = scmp.eq.s32.totalorder %s14, 0
      %p74 = por %p72, %p73
      %p75 = scmp.ne.s32.totalorder %s64, %s67
      %p76 = scmp.eq.s32.totalorder %s19, 1
      %p77 = por %p75, %p76
      %p78 = scmp.ne.s32.totalorder %s67, %s68
      %p79 = scmp.eq.s32.totalorder %s19, 0
      %p80 = por %p78, %p79
      %p81 = scmp.ne.s32.totalorder %s67, %s68
      %p82 = scmp.eq.s32.totalorder %s20, 1
      %p83 = por %p81, %p82
      %p85 = scmp.ne.s32.totalorder %s68, %s84
      %p86 = scmp.eq.s32.totalorder %s20, 0
      %p87 = por %p85, %p86
      %s88 = ssub.s32 %s21, %s33
      %p89 = scmp.eq.s32.totalorder %s88, 0
      %s91 = sadd.s32 %s90, 1
      %s92 = scalar_select %p89, %s90, %s91
      %p95 = pneg %p89
      %p96 = scmp.eq.s32.totalorder %s14, 1
      %p97 = por %p95, %p96
      %p98 = scmp.ne.s32.totalorder %s90, %s93
      %p99 = scmp.eq.s32.totalorder %s14, 0
      %p100 = por %p98, %p99
      %p101 = scmp.ne.s32.totalorder %s90, %s93
      %p102 = scmp.eq.s32.totalorder %s19, 1
      %p103 = por %p101, %p102
      %p104 = scmp.ne.s32.totalorder %s93, %s94
      %p105 = scmp.eq.s32.totalorder %s19, 0
      %p106 = por %p104, %p105
      %p107 = scmp.ne.s32.totalorder %s93, %s94
      %p108 = scmp.eq.s32.totalorder %s20, 1
      %p109 = por %p107, %p108
      %p111 = scmp.ne.s32.totalorder %s94, %s110
      %p112 = scmp.eq.s32.totalorder %s20, 0
      %p113 = por %p111, %p112
      %s114 = ssub.s32 %s21, %s33
      %p115 = scmp.eq.s32.totalorder %s114, 0
      %s117 = sadd.s32 %s116, 1
      %s118 = scalar_select %p115, %s116, %s117
      %p121 = pneg %p115
      %p122 = scmp.eq.s32.totalorder %s14, 1
      %p123 = por %p121, %p122
      %p124 = scmp.ne.s32.totalorder %s116, %s119
      %p125 = scmp.eq.s32.totalorder %s14, 0
      %p126 = por %p124, %p125
      %p127 = scmp.ne.s32.totalorder %s116, %s119
      %p128 = scmp.eq.s32.totalorder %s19, 1
      %p129 = por %p127, %p128
      %p130 = scmp.ne.s32.totalorder %s119, %s120
      %p131 = scmp.eq.s32.totalorder %s19, 0
      %p132 = por %p130, %p131
      %p133 = scmp.ne.s32.totalorder %s119, %s120
      %p134 = scmp.eq.s32.totalorder %s20, 1
      %p135 = por %p133, %p134
      %p137 = scmp.ne.s32.totalorder %s120, %s136
      %p138 = scmp.eq.s32.totalorder %s20, 0
      %p139 = por %p137, %p138
      %s140 = ssub.s32 %s21, %s33
      %s141 = ssub.s32 %s22, %s29
      %s142 = sor.u32 %s140, %s141
      %p143 = scmp.eq.s32.totalorder %s142, 0
      %s145 = sadd.s32 %s144, 1
      %s146 = scalar_select %p143, %s144, %s145
      %p149 = pneg %p143
      %p150 = scmp.eq.s32.totalorder %s14, 1
      %p151 = por %p149, %p150
      %p152 = scmp.ne.s32.totalorder %s144, %s147
      %p153 = scmp.eq.s32.totalorder %s14, 0
      %p154 = por %p152, %p153
      %p155 = scmp.ne.s32.totalorder %s144, %s147
      %p156 = scmp.eq.s32.totalorder %s19, 1
      %p157 = por %p155, %p156
      %p158 = scmp.ne.s32.totalorder %s147, %s148
      %p159 = scmp.eq.s32.totalorder %s19, 0
      %p160 = por %p158, %p159
      %p161 = scmp.ne.s32.totalorder %s147, %s148
      %p162 = scmp.eq.s32.totalorder %s20, 1
      %p163 = por %p161, %p162
      %p165 = scmp.ne.s32.totalorder %s148, %s164
      %p166 = scmp.eq.s32.totalorder %s20, 0
      %p167 = por %p165, %p166
      %p168 = scmp.le.s32.totalorder 1, %s14
      %p169 = scmp.lt.s32.totalorder %s14, 3
      %p170 = pnand %p168, %p169
      %p171 = pneg %p170
      // Predicated region
      $region9: #{tpu_custom_call.1} parent=5 // pred_check
        _
      $region10: #{tpu_custom_call.1} parent=5 // pred_check_branch
        %173 = sbr.rel (%p170) target = $region12
      $region11: #{tpu_custom_call.1} parent=5 // pred_region
        %s174 = ssub.s32 %s14, 1
        // Predicated region
        $region13: #{tpu_custom_call.1} parent=11 // pred_check
          %p175 = pneg %p80
        $region14: #{tpu_custom_call.1} parent=11 // pred_check_branch
          %177 = sbr.rel (%p175) target = $region16
        $region15: #{tpu_custom_call.1} parent=11 // pred_region
          %s178 = smul.u32 8, %s24
          %p179 = scmp.lt.s32.totalorder %s178, 7
          %s180 = scalar_select %p179, %s178, 7
          %s181 = smul.addr %s180, 8
          %s182 = scalar_lea.vmem %s1, %s181
          %s183 = smul.u32 8, %s24
        $region16: #{tpu_custom_call.1} parent=11 // pred_fallthru
          _
        // Predicated region
        $region17: #{tpu_custom_call.1} parent=11 // pred_check
          %p184 = pneg %p106
        $region18: #{tpu_custom_call.1} parent=11 // pred_check_branch
          %186 = sbr.rel (%p184) target = $region20
        $region19: #{tpu_custom_call.1} parent=11 // pred_region
          %p187 = scmp.lt.s32.totalorder %s23, 1
          %s188 = scalar_select %p187, %s23, 1
          %s189 = smul.addr %s188, 2
          %s190 = smul.addr %s189, 4
          %s191 = scalar_lea.vmem %s2, %s190
        $region20: #{tpu_custom_call.1} parent=11 // pred_fallthru
          _
        // Predicated region
        $region21: #{tpu_custom_call.1} parent=11 // pred_check
          %p192 = pneg %p132
        $region22: #{tpu_custom_call.1} parent=11 // pred_check_branch
          %194 = sbr.rel (%p192) target = $region24
        $region23: #{tpu_custom_call.1} parent=11 // pred_region
          %196 = vsyncadd [#allocation3], 0
          %s197 = smul.addr %s23, 32
          %s198 = smul.addr %s197, 8
          %s199 = scalar_lea.hbm %s3, %s198
          %s200 = sshll.u32 %s199, 4
          %s201 = int_to_ptr.hbm [resolvable:$true] %s200
          %s202 = sshll.u32 [#allocation2], 4
          %s203 = int_to_ptr.vmem [resolvable:$true] %s202
          %208 = dma.hbm_to_vmem [thread:$0]  %s201, 4096, %s203, [#allocation3], 128, 128, 8
        $region24: #{tpu_custom_call.1} parent=11 // pred_fallthru
          _
      $region12: #{tpu_custom_call.1} parent=5 // pred_fallthru
        _
      %p209 = scmp.lt.s32.totalorder %s14, 2
      // Predicated region
      $region25: #{tpu_custom_call.1} parent=5 // pred_check
        %p210 = pneg %p209
      $region26: #{tpu_custom_call.1} parent=5 // pred_check_branch
        %212 = sbr.rel (%p210) target = $region28
      $region27: #{tpu_custom_call.1} parent=5 // pred_region
        // Predicated region
        $region29: #{tpu_custom_call.1} parent=27 // pred_check
          %p213 = pneg %p48
        $region30: #{tpu_custom_call.1} parent=27 // pred_check_branch
          %215 = sbr.rel (%p213) target = $region32
        $region31: #{tpu_custom_call.1} parent=27 // pred_region
          %s216 = smul.u32 8, %s22
          %p217 = scmp.lt.s32.totalorder %s21, 1
          %s218 = scalar_select %p217, %s21, 1
          %p219 = scmp.lt.s32.totalorder %s216, 7
          %s220 = scalar_select %p219, %s216, 7
          %s221 = smul.addr %s218, 8
          %s222 = sadd.s32 %s220, %s221
          %s223 = smul.addr %s222, 8
          %s224 = scalar_lea.vmem %s0, %s223
          %s225 = smul.u32 8, %s22
        $region32: #{tpu_custom_call.1} parent=27 // pred_fallthru
          _
      $region28: #{tpu_custom_call.1} parent=5 // pred_fallthru
        _
      %p226 = scmp.le.s32.totalorder 1, %s14
      %p227 = scmp.lt.s32.totalorder %s14, 3
      %p228 = pnand %p226, %p227
      %p229 = pneg %p228
      // Predicated region
      $region33: #{tpu_custom_call.1} parent=5 // pred_check
        _
      $region34: #{tpu_custom_call.1} parent=5 // pred_check_branch
        %231 = sbr.rel (%p228) target = $region36
      $region35: #{tpu_custom_call.1} parent=5 // pred_region
        %s232 = ssub.s32 %s14, 1
        // Predicated region
        $region37: #{tpu_custom_call.1} parent=35 // pred_check
          %p233 = pneg %p132
        $region38: #{tpu_custom_call.1} parent=35 // pred_check_branch
          %235 = sbr.rel (%p233) target = $region40
        $region39: #{tpu_custom_call.1} parent=35 // pred_region
          %237 = dma.done [#allocation3], 4096
        $region40: #{tpu_custom_call.1} parent=35 // pred_fallthru
          _
        %s238 = smul.u32 8, %s24
        %p239 = scmp.lt.s32.totalorder %s23, 1
        %s240 = scalar_select %p239, %s23, 1
        %p241 = scmp.lt.s32.totalorder %s238, 7
        %s242 = scalar_select %p241, %s238, 7
        %s243 = smul.addr %s240, 8
        %s244 = sadd.s32 %s242, %s243
        %s245 = smul.addr %s244, 8
        %s246 = scalar_lea.vmem %s0, %s245
        %p247 = pneg %p54
        %p248 = pneg %p51
        %s249 = smul.u32 8, %s24
        %p250 = scmp.lt.s32.totalorder %s249, 7
        %s251 = scalar_select %p250, %s249, 7
        %s252 = smul.addr %s251, 8
        %s253 = scalar_lea.vmem %s1, %s252
        %p254 = pneg %p80
        %p255 = pneg %p77
        %p256 = scmp.lt.s32.totalorder %s23, 1
        %s257 = scalar_select %p256, %s23, 1
        %s258 = smul.addr %s257, 2
        %s259 = smul.addr %s258, 4
        %s260 = scalar_lea.vmem %s2, %s259
        %p261 = pneg %p106
        %p262 = pneg %p103
        %p263 = pneg %p132
        %p264 = pneg %p129
        %p265 = pneg %p160
        %p266 = pneg %p157
        %s267 = sand.u32 %s147, 1
        %s268 = scalar_lea.sflag [#allocation4], %s267
        %s269 = sand.u32 %s147, 1
        %s270 = smul.addr %s269, 64
        %s271 = scalar_lea.vmem [#allocation5], %s270
        %s272 = smul.u32 8, %s24
        %p273 = scmp.lt.s32.totalorder %s23, 1
        %s274 = scalar_select %p273, %s23, 1
        %p275 = scmp.lt.s32.totalorder %s272, 7
        %s276 = scalar_select %p275, %s272, 7
        %s277 = smul.addr %s274, 8
        %s278 = sadd.s32 %s276, %s277
        %s279 = smul.addr %s278, 8
        %s280 = scalar_lea.vmem %s0, %s279
        %s281 = smul.u32 8, %s24
        %s282 = smul.u32 8, %s24
        %p283 = scmp.lt.s32.totalorder %s282, 7
        %s284 = scalar_select %p283, %s282, 7
        %s285 = smul.addr %s284, 8
        %s286 = scalar_lea.vmem %s1, %s285
        %s287 = smul.u32 8, %s24
        %p288 = scmp.lt.s32.totalorder %s23, 1
        %s289 = scalar_select %p288, %s23, 1
        %s290 = smul.addr %s289, 2
        %s291 = smul.addr %s290, 4
        %s292 = scalar_lea.vmem %s2, %s291
        %s293 = smul.u32 8, %s24
        %v294 = vld [vmem:[%s280] sm:$0xff]
        %v295 = vld [vmem:[%s280 + $0x8] sm:$0xff]
        %v296 = vld [vmem:[%s280 + $0x10] sm:$0xff]
        %v297 = vld [vmem:[%s280 + $0x18] sm:$0xff]
        %v298 = vld [vmem:[%s280 + $0x20] sm:$0xff]
        %v299 = vld [vmem:[%s280 + $0x28] sm:$0xff]
        %v300 = vld [vmem:[%s280 + $0x30] sm:$0xff]
        %v301 = vld [vmem:[%s280 + $0x38] sm:$0xff]
        %v302 = vld [vmem:[%s286] sm:$0xff]
        %v303 = vld [vmem:[%s286 + $0x8] sm:$0xff]
        %v304 = vld [vmem:[%s286 + $0x10] sm:$0xff]
        %v305 = vld [vmem:[%s286 + $0x18] sm:$0xff]
        %v306 = vld [vmem:[%s286 + $0x20] sm:$0xff]
        %v307 = vld [vmem:[%s286 + $0x28] sm:$0xff]
        %v308 = vld [vmem:[%s286 + $0x30] sm:$0xff]
        %v309 = vld [vmem:[%s286 + $0x38] sm:$0xff]
        %v310 = vld [vmem:[%s292] sm:$0x77]
        %v311 = vld [vmem:[#allocation2] sm:$0xff]
        %v312 = vld [vmem:[#allocation2 + $0x8] sm:$0xff]
        %v313 = vld [vmem:[#allocation2 + $0x10] sm:$0xff]
        %v314 = vld [vmem:[#allocation2 + $0x18] sm:$0xff]
        %v315 = vld [vmem:[#allocation2 + $0x20] sm:$0xff]
        %v316 = vld [vmem:[#allocation2 + $0x28] sm:$0xff]
        %v317 = vld [vmem:[#allocation2 + $0x30] sm:$0xff]
        %v318 = vld [vmem:[#allocation2 + $0x38] sm:$0xff]
        %v319 = vld [vmem:[#allocation2 + $0x40] sm:$0xff]
        %v320 = vld [vmem:[#allocation2 + $0x48] sm:$0xff]
        %v321 = vld [vmem:[#allocation2 + $0x50] sm:$0xff]
        %v322 = vld [vmem:[#allocation2 + $0x58] sm:$0xff]
        %v323 = vld [vmem:[#allocation2 + $0x60] sm:$0xff]
        %v324 = vld [vmem:[#allocation2 + $0x68] sm:$0xff]
        %v325 = vld [vmem:[#allocation2 + $0x70] sm:$0xff]
        %v326 = vld [vmem:[#allocation2 + $0x78] sm:$0xff]
        %v327 = vld [vmem:[#allocation2 + $0x80] sm:$0xff]
        %v328 = vld [vmem:[#allocation2 + $0x88] sm:$0xff]
        %v329 = vld [vmem:[#allocation2 + $0x90] sm:$0xff]
        %v330 = vld [vmem:[#allocation2 + $0x98] sm:$0xff]
        %v331 = vld [vmem:[#allocation2 + $0xa0] sm:$0xff]
        %v332 = vld [vmem:[#allocation2 + $0xa8] sm:$0xff]
        %v333 = vld [vmem:[#allocation2 + $0xb0] sm:$0xff]
        %v334 = vld [vmem:[#allocation2 + $0xb8] sm:$0xff]
        %v335 = vld [vmem:[#allocation2 + $0xc0] sm:$0xff]
        %v336 = vld [vmem:[#allocation2 + $0xc8] sm:$0xff]
        %v337 = vld [vmem:[#allocation2 + $0xd0] sm:$0xff]
        %v338 = vld [vmem:[#allocation2 + $0xd8] sm:$0xff]
        %v339 = vld [vmem:[#allocation2 + $0xe0] sm:$0xff]
        %v340 = vld [vmem:[#allocation2 + $0xe8] sm:$0xff]
        %v341 = vld [vmem:[#allocation2 + $0xf0] sm:$0xff]
        %v342 = vld [vmem:[#allocation2 + $0xf8] sm:$0xff]
        %344 = vset.pattern.permute.xlu0 0
        %345 = vperm.xlu0 %344, %v294
        %v346 = vpop.permute.xlu0 %345
        %349 = vset.pattern.permute.xlu0 0
        %350 = vperm.xlu0 %349, %v295
        %v351 = vpop.permute.xlu0 %350
        %354 = vset.pattern.permute.xlu0 0
        %355 = vperm.xlu0 %354, %v296
        %v356 = vpop.permute.xlu0 %355
        %359 = vset.pattern.permute.xlu0 0
        %360 = vperm.xlu0 %359, %v297
        %v361 = vpop.permute.xlu0 %360
        %364 = vset.pattern.permute.xlu0 0
        %365 = vperm.xlu0 %364, %v298
        %v366 = vpop.permute.xlu0 %365
        %369 = vset.pattern.permute.xlu0 0
        %370 = vperm.xlu0 %369, %v299
        %v371 = vpop.permute.xlu0 %370
        %374 = vset.pattern.permute.xlu0 0
        %375 = vperm.xlu0 %374, %v300
        %v376 = vpop.permute.xlu0 %375
        %379 = vset.pattern.permute.xlu0 0
        %380 = vperm.xlu0 %379, %v301
        %v381 = vpop.permute.xlu0 %380
        %v384 = vperm.slane %v310, 0
        %v385 = vperm.slane %v310, 4
        %v388 = vperm.slane %v384, 0
        %v389 = vperm.slane %v385, 0
        %v390 = vsub.f32 %v346, %v388
        %v391 = vsub.f32 %v346, %v389
        %v392 = vsub.f32 %v351, %v388
        %v393 = vsub.f32 %v351, %v389
        %v394 = vsub.f32 %v356, %v388
        %v395 = vsub.f32 %v356, %v389
        %v396 = vsub.f32 %v361, %v388
        %v397 = vsub.f32 %v361, %v389
        %v398 = vsub.f32 %v366, %v388
        %v399 = vsub.f32 %v366, %v389
        %v400 = vsub.f32 %v371, %v388
        %v401 = vsub.f32 %v371, %v389
        %v402 = vsub.f32 %v376, %v388
        %v403 = vsub.f32 %v376, %v389
        %v404 = vsub.f32 %v381, %v388
        %v405 = vsub.f32 %v381, %v389
        %v406 = vmul.f32 %v390, %v390
        %v407 = vmul.f32 %v391, %v391
        %v408 = vmul.f32 %v392, %v392
        %v409 = vmul.f32 %v393, %v393
        %v410 = vmul.f32 %v394, %v394
        %v411 = vmul.f32 %v395, %v395
        %v412 = vmul.f32 %v396, %v396
        %v413 = vmul.f32 %v397, %v397
        %v414 = vmul.f32 %v398, %v398
        %v415 = vmul.f32 %v399, %v399
        %v416 = vmul.f32 %v400, %v400
        %v417 = vmul.f32 %v401, %v401
        %v418 = vmul.f32 %v402, %v402
        %v419 = vmul.f32 %v403, %v403
        %v420 = vmul.f32 %v404, %v404
        %v421 = vmul.f32 %v405, %v405
        %v422 = vadd.f32 %v406, 0.0
        %v423 = vadd.f32 %v407, 0.0
        %v424 = vadd.f32 %v408, 0.0
        %v425 = vadd.f32 %v409, 0.0
        %v426 = vadd.f32 %v410, 0.0
        %v427 = vadd.f32 %v411, 0.0
        %v428 = vadd.f32 %v412, 0.0
        %v429 = vadd.f32 %v413, 0.0
        %v430 = vadd.f32 %v414, 0.0
        %v431 = vadd.f32 %v415, 0.0
        %v432 = vadd.f32 %v416, 0.0
        %v433 = vadd.f32 %v417, 0.0
        %v434 = vadd.f32 %v418, 0.0
        %v435 = vadd.f32 %v419, 0.0
        %v436 = vadd.f32 %v420, 0.0
        %v437 = vadd.f32 %v421, 0.0
        %438 = vset.pattern.permute.xlu0 1
        %439 = vperm.xlu0 %438, %v294
        %v440 = vpop.permute.xlu0 %439
        %442 = vset.pattern.permute.xlu0 1
        %443 = vperm.xlu0 %442, %v295
        %v444 = vpop.permute.xlu0 %443
        %446 = vset.pattern.permute.xlu0 1
        %447 = vperm.xlu0 %446, %v296
        %v448 = vpop.permute.xlu0 %447
        %450 = vset.pattern.permute.xlu0 1
        %451 = vperm.xlu0 %450, %v297
        %v452 = vpop.permute.xlu0 %451
        %454 = vset.pattern.permute.xlu0 1
        %455 = vperm.xlu0 %454, %v298
        %v456 = vpop.permute.xlu0 %455
        %458 = vset.pattern.permute.xlu0 1
        %459 = vperm.xlu0 %458, %v299
        %v460 = vpop.permute.xlu0 %459
        %462 = vset.pattern.permute.xlu0 1
        %463 = vperm.xlu0 %462, %v300
        %v464 = vpop.permute.xlu0 %463
        %466 = vset.pattern.permute.xlu0 1
        %467 = vperm.xlu0 %466, %v301
        %v468 = vpop.permute.xlu0 %467
        %v470 = vperm.slane %v310, 1
        %v471 = vperm.slane %v310, 5
        %v474 = vperm.slane %v470, 1
        %v475 = vperm.slane %v471, 1
        %v476 = vsub.f32 %v440, %v474
        %v477 = vsub.f32 %v440, %v475
        %v478 = vsub.f32 %v444, %v474
        %v479 = vsub.f32 %v444, %v475
        %v480 = vsub.f32 %v448, %v474
        %v481 = vsub.f32 %v448, %v475
        %v482 = vsub.f32 %v452, %v474
        %v483 = vsub.f32 %v452, %v475
        %v484 = vsub.f32 %v456, %v474
        %v485 = vsub.f32 %v456, %v475
        %v486 = vsub.f32 %v460, %v474
        %v487 = vsub.f32 %v460, %v475
        %v488 = vsub.f32 %v464, %v474
        %v489 = vsub.f32 %v464, %v475
        %v490 = vsub.f32 %v468, %v474
        %v491 = vsub.f32 %v468, %v475
        %v492 = vmul.f32 %v476, %v476
        %v493 = vmul.f32 %v477, %v477
        %v494 = vmul.f32 %v478, %v478
        %v495 = vmul.f32 %v479, %v479
        %v496 = vmul.f32 %v480, %v480
        %v497 = vmul.f32 %v481, %v481
        %v498 = vmul.f32 %v482, %v482
        %v499 = vmul.f32 %v483, %v483
        %v500 = vmul.f32 %v484, %v484
        %v501 = vmul.f32 %v485, %v485
        %v502 = vmul.f32 %v486, %v486
        %v503 = vmul.f32 %v487, %v487
        %v504 = vmul.f32 %v488, %v488
        %v505 = vmul.f32 %v489, %v489
        %v506 = vmul.f32 %v490, %v490
        %v507 = vmul.f32 %v491, %v491
        %v508 = vadd.f32 %v422, %v492
        %v509 = vadd.f32 %v423, %v493
        %v510 = vadd.f32 %v424, %v494
        %v511 = vadd.f32 %v425, %v495
        %v512 = vadd.f32 %v426, %v496
        %v513 = vadd.f32 %v427, %v497
        %v514 = vadd.f32 %v428, %v498
        %v515 = vadd.f32 %v429, %v499
        %v516 = vadd.f32 %v430, %v500
        %v517 = vadd.f32 %v431, %v501
        %v518 = vadd.f32 %v432, %v502
        %v519 = vadd.f32 %v433, %v503
        %v520 = vadd.f32 %v434, %v504
        %v521 = vadd.f32 %v435, %v505
        %v522 = vadd.f32 %v436, %v506
        %v523 = vadd.f32 %v437, %v507
        %524 = vset.pattern.permute.xlu0 2
        %525 = vperm.xlu0 %524, %v294
        %v526 = vpop.permute.xlu0 %525
        %528 = vset.pattern.permute.xlu0 2
        %529 = vperm.xlu0 %528, %v295
        %v530 = vpop.permute.xlu0 %529
        %532 = vset.pattern.permute.xlu0 2
        %533 = vperm.xlu0 %532, %v296
        %v534 = vpop.permute.xlu0 %533
        %536 = vset.pattern.permute.xlu0 2
        %537 = vperm.xlu0 %536, %v297
        %v538 = vpop.permute.xlu0 %537
        %540 = vset.pattern.permute.xlu0 2
        %541 = vperm.xlu0 %540, %v298
        %v542 = vpop.permute.xlu0 %541
        %544 = vset.pattern.permute.xlu0 2
        %545 = vperm.xlu0 %544, %v299
        %v546 = vpop.permute.xlu0 %545
        %548 = vset.pattern.permute.xlu0 2
        %549 = vperm.xlu0 %548, %v300
        %v550 = vpop.permute.xlu0 %549
        %552 = vset.pattern.permute.xlu0 2
        %553 = vperm.xlu0 %552, %v301
        %v554 = vpop.permute.xlu0 %553
        %v556 = vperm.slane %v310, 2
        %v557 = vperm.slane %v310, 6
        %v560 = vperm.slane %v556, 2
        %v561 = vperm.slane %v557, 2
        %v562 = vsub.f32 %v526, %v560
        %v563 = vsub.f32 %v526, %v561
        %v564 = vsub.f32 %v530, %v560
        %v565 = vsub.f32 %v530, %v561
        %v566 = vsub.f32 %v534, %v560
        %v567 = vsub.f32 %v534, %v561
        %v568 = vsub.f32 %v538, %v560
        %v569 = vsub.f32 %v538, %v561
        %v570 = vsub.f32 %v542, %v560
        %v571 = vsub.f32 %v542, %v561
        %v572 = vsub.f32 %v546, %v560
        %v573 = vsub.f32 %v546, %v561
        %v574 = vsub.f32 %v550, %v560
        %v575 = vsub.f32 %v550, %v561
        %v576 = vsub.f32 %v554, %v560
        %v577 = vsub.f32 %v554, %v561
        %v578 = vmul.f32 %v562, %v562
        %v579 = vmul.f32 %v563, %v563
        %v580 = vmul.f32 %v564, %v564
        %v581 = vmul.f32 %v565, %v565
        %v582 = vmul.f32 %v566, %v566
        %v583 = vmul.f32 %v567, %v567
        %v584 = vmul.f32 %v568, %v568
        %v585 = vmul.f32 %v569, %v569
        %v586 = vmul.f32 %v570, %v570
        %v587 = vmul.f32 %v571, %v571
        %v588 = vmul.f32 %v572, %v572
        %v589 = vmul.f32 %v573, %v573
        %v590 = vmul.f32 %v574, %v574
        %v591 = vmul.f32 %v575, %v575
        %v592 = vmul.f32 %v576, %v576
        %v593 = vmul.f32 %v577, %v577
        %v594 = vadd.f32 %v508, %v578
        %v595 = vadd.f32 %v509, %v579
        %v596 = vadd.f32 %v510, %v580
        %v597 = vadd.f32 %v511, %v581
        %v598 = vadd.f32 %v512, %v582
        %v599 = vadd.f32 %v513, %v583
        %v600 = vadd.f32 %v514, %v584
        %v601 = vadd.f32 %v515, %v585
        %v602 = vadd.f32 %v516, %v586
        %v603 = vadd.f32 %v517, %v587
        %v604 = vadd.f32 %v518, %v588
        %v605 = vadd.f32 %v519, %v589
        %v606 = vadd.f32 %v520, %v590
        %v607 = vadd.f32 %v521, %v591
        %v608 = vadd.f32 %v522, %v592
        %v609 = vadd.f32 %v523, %v593
        %v610 = vlaneseq
        %v611 = vand.u32 %v610, 127
        %v612 = vadd.s32 %v611, 128
        %613 = vset.pattern.permute.xlu0 0
        %614 = vperm.xlu0 %613, %v302
        %v615 = vpop.permute.xlu0 %614
        %616 = vset.pattern.permute.xlu0 0
        %617 = vperm.xlu0 %616, %v303
        %v618 = vpop.permute.xlu0 %617
        %619 = vset.pattern.permute.xlu0 0
        %620 = vperm.xlu0 %619, %v304
        %v621 = vpop.permute.xlu0 %620
        %622 = vset.pattern.permute.xlu0 0
        %623 = vperm.xlu0 %622, %v305
        %v624 = vpop.permute.xlu0 %623
        %625 = vset.pattern.permute.xlu0 0
        %626 = vperm.xlu0 %625, %v306
        %v627 = vpop.permute.xlu0 %626
        %628 = vset.pattern.permute.xlu0 0
        %629 = vperm.xlu0 %628, %v307
        %v630 = vpop.permute.xlu0 %629
        %631 = vset.pattern.permute.xlu0 0
        %632 = vperm.xlu0 %631, %v308
        %v633 = vpop.permute.xlu0 %632
        %634 = vset.pattern.permute.xlu0 0
        %635 = vperm.xlu0 %634, %v309
        %v636 = vpop.permute.xlu0 %635
        %vm637 = vcmp.eq.s32.totalorder %v611, %v615
        %vm638 = vcmp.eq.s32.totalorder %v612, %v615
        %vm639 = vcmp.eq.s32.totalorder %v611, %v618
        %vm640 = vcmp.eq.s32.totalorder %v612, %v618
        %vm641 = vcmp.eq.s32.totalorder %v611, %v621
        %vm642 = vcmp.eq.s32.totalorder %v612, %v621
        %vm643 = vcmp.eq.s32.totalorder %v611, %v624
        %vm644 = vcmp.eq.s32.totalorder %v612, %v624
        %vm645 = vcmp.eq.s32.totalorder %v611, %v627
        %vm646 = vcmp.eq.s32.totalorder %v612, %v627
        %vm647 = vcmp.eq.s32.totalorder %v611, %v630
        %vm648 = vcmp.eq.s32.totalorder %v612, %v630
        %vm649 = vcmp.eq.s32.totalorder %v611, %v633
        %vm650 = vcmp.eq.s32.totalorder %v612, %v633
        %vm651 = vcmp.eq.s32.totalorder %v611, %v636
        %vm652 = vcmp.eq.s32.totalorder %v612, %v636
        %v653 = vsel %vm637, inf, %v594
        %v654 = vsel %vm638, inf, %v595
        %v655 = vsel %vm639, inf, %v596
        %v656 = vsel %vm640, inf, %v597
        %v657 = vsel %vm641, inf, %v598
        %v658 = vsel %vm642, inf, %v599
        %v659 = vsel %vm643, inf, %v600
        %v660 = vsel %vm644, inf, %v601
        %v661 = vsel %vm645, inf, %v602
        %v662 = vsel %vm646, inf, %v603
        %v663 = vsel %vm647, inf, %v604
        %v664 = vsel %vm648, inf, %v605
        %v665 = vsel %vm649, inf, %v606
        %v666 = vsel %vm650, inf, %v607
        %v667 = vsel %vm651, inf, %v608
        %v668 = vsel %vm652, inf, %v609
        %v669 = vmin.f32 %v653, %v654
        %670 = vmin.xlane.f32.xlu0 %v669
        %v671 = vpop.xlane.xlu0 %670
        %v672 = vmin.f32 %v655, %v656
        %673 = vmin.xlane.f32.xlu0 %v672
        %v674 = vpop.xlane.xlu0 %673
        %v675 = vmin.f32 %v657, %v658
        %676 = vmin.xlane.f32.xlu0 %v675
        %v677 = vpop.xlane.xlu0 %676
        %v678 = vmin.f32 %v659, %v660
        %679 = vmin.xlane.f32.xlu0 %v678
        %v680 = vpop.xlane.xlu0 %679
        %v681 = vmin.f32 %v661, %v662
        %682 = vmin.xlane.f32.xlu0 %v681
        %v683 = vpop.xlane.xlu0 %682
        %v684 = vmin.f32 %v663, %v664
        %685 = vmin.xlane.f32.xlu0 %v684
        %v686 = vpop.xlane.xlu0 %685
        %v687 = vmin.f32 %v665, %v666
        %688 = vmin.xlane.f32.xlu0 %v687
        %v689 = vpop.xlane.xlu0 %688
        %v690 = vmin.f32 %v667, %v668
        %691 = vmin.xlane.f32.xlu0 %v690
        %v692 = vpop.xlane.xlu0 %691
        %vm693 = vcmp.eq.f32.partialorder %v653, %v671
        %vm694 = vcmp.eq.f32.partialorder %v654, %v671
        %vm695 = vcmp.eq.f32.partialorder %v655, %v674
        %vm696 = vcmp.eq.f32.partialorder %v656, %v674
        %vm697 = vcmp.eq.f32.partialorder %v657, %v677
        %vm698 = vcmp.eq.f32.partialorder %v658, %v677
        %vm699 = vcmp.eq.f32.partialorder %v659, %v680
        %vm700 = vcmp.eq.f32.partialorder %v660, %v680
        %vm701 = vcmp.eq.f32.partialorder %v661, %v683
        %vm702 = vcmp.eq.f32.partialorder %v662, %v683
        %vm703 = vcmp.eq.f32.partialorder %v663, %v686
        %vm704 = vcmp.eq.f32.partialorder %v664, %v686
        %vm705 = vcmp.eq.f32.partialorder %v665, %v689
        %vm706 = vcmp.eq.f32.partialorder %v666, %v689
        %vm707 = vcmp.eq.f32.partialorder %v667, %v692
        %vm708 = vcmp.eq.f32.partialorder %v668, %v692
        %v709 = vsel %vm693, %v611, 256
        %v710 = vsel %vm694, %v612, 256
        %v711 = vsel %vm695, %v611, 256
        %v712 = vsel %vm696, %v612, 256
        %v713 = vsel %vm697, %v611, 256
        %v714 = vsel %vm698, %v612, 256
        %v715 = vsel %vm699, %v611, 256
        %v716 = vsel %vm700, %v612, 256
        %v717 = vsel %vm701, %v611, 256
        %v718 = vsel %vm702, %v612, 256
        %v719 = vsel %vm703, %v611, 256
        %v720 = vsel %vm704, %v612, 256
        %v721 = vsel %vm705, %v611, 256
        %v722 = vsel %vm706, %v612, 256
        %v723 = vsel %vm707, %v611, 256
        %v724 = vsel %vm708, %v612, 256
        %vm725 = vcmp.lt.s32.totalorder %v709, %v710
        %v726 = vsel %vm725, %v709, %v710
        %v727 = vand.u32 %v726, 65535
        %v728 = vshra.s32 %v726, 16
        %v729 = vcvt.s32.f32 %v727
        %v730 = vcvt.s32.f32 %v728
        %731 = vmin.xlane.f32.xlu0 %v730
        %v732 = vpop.xlane.xlu0 %731
        %vm733 = vcmp.eq.f32.partialorder %v730, %v732
        %v734 = vsel %vm733, %v729, inf
        %735 = vmin.xlane.f32.xlu0 %v734
        %v736 = vpop.xlane.xlu0 %735
        %v737 = vcvt.f32.s32 %v736
        %v738 = vcvt.f32.s32 %v732
        %v739 = vshll.u32 %v738, 16
        %v740 = vadd.s32 %v739, %v737
        %vm741 = vcmp.lt.s32.totalorder %v711, %v712
        %v742 = vsel %vm741, %v711, %v712
        %v743 = vand.u32 %v742, 65535
        %v744 = vshra.s32 %v742, 16
        %v745 = vcvt.s32.f32 %v743
        %v746 = vcvt.s32.f32 %v744
        %747 = vmin.xlane.f32.xlu0 %v746
        %v748 = vpop.xlane.xlu0 %747
        %vm749 = vcmp.eq.f32.partialorder %v746, %v748
        %v750 = vsel %vm749, %v745, inf
        %751 = vmin.xlane.f32.xlu0 %v750
        %v752 = vpop.xlane.xlu0 %751
        %v753 = vcvt.f32.s32 %v752
        %v754 = vcvt.f32.s32 %v748
        %v755 = vshll.u32 %v754, 16
        %v756 = vadd.s32 %v755, %v753
        %vm757 = vcmp.lt.s32.totalorder %v713, %v714
        %v758 = vsel %vm757, %v713, %v714
        %v759 = vand.u32 %v758, 65535
        %v760 = vshra.s32 %v758, 16
        %v761 = vcvt.s32.f32 %v759
        %v762 = vcvt.s32.f32 %v760
        %763 = vmin.xlane.f32.xlu0 %v762
        %v764 = vpop.xlane.xlu0 %763
        %vm765 = vcmp.eq.f32.partialorder %v762, %v764
        %v766 = vsel %vm765, %v761, inf
        %767 = vmin.xlane.f32.xlu0 %v766
        %v768 = vpop.xlane.xlu0 %767
        %v769 = vcvt.f32.s32 %v768
        %v770 = vcvt.f32.s32 %v764
        %v771 = vshll.u32 %v770, 16
        %v772 = vadd.s32 %v771, %v769
        %vm773 = vcmp.lt.s32.totalorder %v715, %v716
        %v774 = vsel %vm773, %v715, %v716
        %v775 = vand.u32 %v774, 65535
        %v776 = vshra.s32 %v774, 16
        %v777 = vcvt.s32.f32 %v775
        %v778 = vcvt.s32.f32 %v776
        %779 = vmin.xlane.f32.xlu0 %v778
        %v780 = vpop.xlane.xlu0 %779
        %vm781 = vcmp.eq.f32.partialorder %v778, %v780
        %v782 = vsel %vm781, %v777, inf
        %783 = vmin.xlane.f32.xlu0 %v782
        %v784 = vpop.xlane.xlu0 %783
        %v785 = vcvt.f32.s32 %v784
        %v786 = vcvt.f32.s32 %v780
        %v787 = vshll.u32 %v786, 16
        %v788 = vadd.s32 %v787, %v785
        %vm789 = vcmp.lt.s32.totalorder %v717, %v718
        %v790 = vsel %vm789, %v717, %v718
        %v791 = vand.u32 %v790, 65535
        %v792 = vshra.s32 %v790, 16
        %v793 = vcvt.s32.f32 %v791
        %v794 = vcvt.s32.f32 %v792
        %795 = vmin.xlane.f32.xlu0 %v794
        %v796 = vpop.xlane.xlu0 %795
        %vm797 = vcmp.eq.f32.partialorder %v794, %v796
        %v798 = vsel %vm797, %v793, inf
        %799 = vmin.xlane.f32.xlu0 %v798
        %v800 = vpop.xlane.xlu0 %799
        %v801 = vcvt.f32.s32 %v800
        %v802 = vcvt.f32.s32 %v796
        %v803 = vshll.u32 %v802, 16
        %v804 = vadd.s32 %v803, %v801
        %vm805 = vcmp.lt.s32.totalorder %v719, %v720
        %v806 = vsel %vm805, %v719, %v720
        %v807 = vand.u32 %v806, 65535
        %v808 = vshra.s32 %v806, 16
        %v809 = vcvt.s32.f32 %v807
        %v810 = vcvt.s32.f32 %v808
        %811 = vmin.xlane.f32.xlu0 %v810
        %v812 = vpop.xlane.xlu0 %811
        %vm813 = vcmp.eq.f32.partialorder %v810, %v812
        %v814 = vsel %vm813, %v809, inf
        %815 = vmin.xlane.f32.xlu0 %v814
        %v816 = vpop.xlane.xlu0 %815
        %v817 = vcvt.f32.s32 %v816
        %v818 = vcvt.f32.s32 %v812
        %v819 = vshll.u32 %v818, 16
        %v820 = vadd.s32 %v819, %v817
        %vm821 = vcmp.lt.s32.totalorder %v721, %v722
        %v822 = vsel %vm821, %v721, %v722
        %v823 = vand.u32 %v822, 65535
        %v824 = vshra.s32 %v822, 16
        %v825 = vcvt.s32.f32 %v823
        %v826 = vcvt.s32.f32 %v824
        %827 = vmin.xlane.f32.xlu0 %v826
        %v828 = vpop.xlane.xlu0 %827
        %vm829 = vcmp.eq.f32.partialorder %v826, %v828
        %v830 = vsel %vm829, %v825, inf
        %831 = vmin.xlane.f32.xlu0 %v830
        %v832 = vpop.xlane.xlu0 %831
        %v833 = vcvt.f32.s32 %v832
        %v834 = vcvt.f32.s32 %v828
        %v835 = vshll.u32 %v834, 16
        %v836 = vadd.s32 %v835, %v833
        %vm837 = vcmp.lt.s32.totalorder %v723, %v724
        %v838 = vsel %vm837, %v723, %v724
        %v839 = vand.u32 %v838, 65535
        %v840 = vshra.s32 %v838, 16
        %v841 = vcvt.s32.f32 %v839
        %v842 = vcvt.s32.f32 %v840
        %843 = vmin.xlane.f32.xlu0 %v842
        %v844 = vpop.xlane.xlu0 %843
        %vm845 = vcmp.eq.f32.partialorder %v842, %v844
        %v846 = vsel %vm845, %v841, inf
        %847 = vmin.xlane.f32.xlu0 %v846
        %v848 = vpop.xlane.xlu0 %847
        %v849 = vcvt.f32.s32 %v848
        %v850 = vcvt.f32.s32 %v844
        %v851 = vshll.u32 %v850, 16
        %v852 = vadd.s32 %v851, %v849
        %vm853 = vcmp.eq.s32.totalorder %v611, %v740
        %vm854 = vcmp.eq.s32.totalorder %v612, %v740
        %vm855 = vcmp.eq.s32.totalorder %v611, %v756
        %vm856 = vcmp.eq.s32.totalorder %v612, %v756
        %vm857 = vcmp.eq.s32.totalorder %v611, %v772
        %vm858 = vcmp.eq.s32.totalorder %v612, %v772
        %vm859 = vcmp.eq.s32.totalorder %v611, %v788
        %vm860 = vcmp.eq.s32.totalorder %v612, %v788
        %vm861 = vcmp.eq.s32.totalorder %v611, %v804
        %vm862 = vcmp.eq.s32.totalorder %v612, %v804
        %vm863 = vcmp.eq.s32.totalorder %v611, %v820
        %vm864 = vcmp.eq.s32.totalorder %v612, %v820
        %vm865 = vcmp.eq.s32.totalorder %v611, %v836
        %vm866 = vcmp.eq.s32.totalorder %v612, %v836
        %vm867 = vcmp.eq.s32.totalorder %v611, %v852
        %vm868 = vcmp.eq.s32.totalorder %v612, %v852
        %v869 = vsel %vm853, 1, 0
        %v870 = vsel %vm854, 1, 0
        %v871 = vsel %vm855, 1, 0
        %v872 = vsel %vm856, 1, 0
        %v873 = vsel %vm857, 1, 0
        %v874 = vsel %vm858, 1, 0
        %v875 = vsel %vm859, 1, 0
        %v876 = vsel %vm860, 1, 0
        %v877 = vsel %vm861, 1, 0
        %v878 = vsel %vm862, 1, 0
        %v879 = vsel %vm863, 1, 0
        %v880 = vsel %vm864, 1, 0
        %v881 = vsel %vm865, 1, 0
        %v882 = vsel %vm866, 1, 0
        %v883 = vsel %vm867, 1, 0
        %v884 = vsel %vm868, 1, 0
        %v885 = vcvt.s32.f32 %v869
        %v886 = vcvt.s32.f32 %v870
        %v887 = vcvt.s32.f32 %v871
        %v888 = vcvt.s32.f32 %v872
        %v889 = vcvt.s32.f32 %v873
        %v890 = vcvt.s32.f32 %v874
        %v891 = vcvt.s32.f32 %v875
        %v892 = vcvt.s32.f32 %v876
        %v893 = vcvt.s32.f32 %v877
        %v894 = vcvt.s32.f32 %v878
        %v895 = vcvt.s32.f32 %v879
        %v896 = vcvt.s32.f32 %v880
        %v897 = vcvt.s32.f32 %v881
        %v898 = vcvt.s32.f32 %v882
        %v899 = vcvt.s32.f32 %v883
        %v900 = vcvt.s32.f32 %v884
        %901 = vmatpush.msra.mxu0 %v326
        %902 = vmatpush.msra.mxu0 %v325
        %903 = vmatpush.msra.mxu0 %v324
        %904 = vmatpush.msra.mxu0 %v323
        %905 = vmatpush.msra.mxu0 %v322
        %906 = vmatpush.msra.mxu0 %v321
        %907 = vmatpush.msra.mxu0 %v320
        %908 = vmatpush.msra.mxu0 %v319
        %909 = vmatpush.msra.mxu0 %v318
        %910 = vmatpush.msra.mxu0 %v317
        %911 = vmatpush.msra.mxu0 %v316
        %912 = vmatpush.msra.mxu0 %v315
        %913 = vmatpush.msra.mxu0 %v314
        %914 = vmatpush.msra.mxu0 %v313
        %915 = vmatpush.msra.mxu0 %v312
        %916 = vmatpush.msra.mxu0 %v311
        %917 = vmatmul.f32.gmra.mxu0 %v885
        %v918 = vpop.f32.mrf.mxu0
        %v919 = vadd.f32 0.0, %v918
        %920 = vmatmul.f32.gmra.mxu0 %v887
        %v921 = vpop.f32.mrf.mxu0
        %v922 = vadd.f32 0.0, %v921
        %923 = vmatmul.f32.gmra.mxu0 %v889
        %v924 = vpop.f32.mrf.mxu0
        %v925 = vadd.f32 0.0, %v924
        %926 = vmatmul.f32.gmra.mxu0 %v891
        %v927 = vpop.f32.mrf.mxu0
        %v928 = vadd.f32 0.0, %v927
        %929 = vmatmul.f32.gmra.mxu0 %v893
        %v930 = vpop.f32.mrf.mxu0
        %v931 = vadd.f32 0.0, %v930
        %932 = vmatmul.f32.gmra.mxu0 %v895
        %v933 = vpop.f32.mrf.mxu0
        %v934 = vadd.f32 0.0, %v933
        %935 = vmatmul.f32.gmra.mxu0 %v897
        %v936 = vpop.f32.mrf.mxu0
        %v937 = vadd.f32 0.0, %v936
        %938 = vmatmul.f32.gmra.mxu0 %v899
        %v939 = vpop.f32.mrf.mxu0
        %v940 = vadd.f32 0.0, %v939
        %941 = vdwg.mxu0
        %942 = vmatpush.msra.mxu0 %v342
        %943 = vmatpush.msra.mxu0 %v341
        %944 = vmatpush.msra.mxu0 %v340
        %945 = vmatpush.msra.mxu0 %v339
        %946 = vmatpush.msra.mxu0 %v338
        %947 = vmatpush.msra.mxu0 %v337
        %948 = vmatpush.msra.mxu0 %v336
        %949 = vmatpush.msra.mxu0 %v335
        %950 = vmatpush.msra.mxu0 %v334
        %951 = vmatpush.msra.mxu0 %v333
        %952 = vmatpush.msra.mxu0 %v332
        %953 = vmatpush.msra.mxu0 %v331
        %954 = vmatpush.msra.mxu0 %v330
        %955 = vmatpush.msra.mxu0 %v329
        %956 = vmatpush.msra.mxu0 %v328
        %957 = vmatpush.msra.mxu0 %v327
        %958 = vmatmul.f32.gmra.mxu0 %v886
        %v959 = vpop.f32.mrf.mxu0
        %v960 = vadd.f32 %v919, %v959
        %961 = vmatmul.f32.gmra.mxu0 %v888
        %v962 = vpop.f32.mrf.mxu0
        %v963 = vadd.f32 %v922, %v962
        %964 = vmatmul.f32.gmra.mxu0 %v890
        %v965 = vpop.f32.mrf.mxu0
        %v966 = vadd.f32 %v925, %v965
        %967 = vmatmul.f32.gmra.mxu0 %v892
        %v968 = vpop.f32.mrf.mxu0
        %v969 = vadd.f32 %v928, %v968
        %970 = vmatmul.f32.gmra.mxu0 %v894
        %v971 = vpop.f32.mrf.mxu0
        %v972 = vadd.f32 %v931, %v971
        %973 = vmatmul.f32.gmra.mxu0 %v896
        %v974 = vpop.f32.mrf.mxu0
        %v975 = vadd.f32 %v934, %v974
        %976 = vmatmul.f32.gmra.mxu0 %v898
        %v977 = vpop.f32.mrf.mxu0
        %v978 = vadd.f32 %v937, %v977
        %979 = vmatmul.f32.gmra.mxu0 %v900
        %v980 = vpop.f32.mrf.mxu0
        %v981 = vadd.f32 %v940, %v980
        %982 = vdwg.mxu0
        %v983 = vsel %vm853, inf, %v653
        %v984 = vsel %vm854, inf, %v654
        %v985 = vsel %vm855, inf, %v655
        %v986 = vsel %vm856, inf, %v656
        %v987 = vsel %vm857, inf, %v657
        %v988 = vsel %vm858, inf, %v658
        %v989 = vsel %vm859, inf, %v659
        %v990 = vsel %vm860, inf, %v660
        %v991 = vsel %vm861, inf, %v661
        %v992 = vsel %vm862, inf, %v662
        %v993 = vsel %vm863, inf, %v663
        %v994 = vsel %vm864, inf, %v664
        %v995 = vsel %vm865, inf, %v665
        %v996 = vsel %vm866, inf, %v666
        %v997 = vsel %vm867, inf, %v667
        %v998 = vsel %vm868, inf, %v668
        %v999 = vmin.f32 %v983, %v984
        %1000 = vmin.xlane.f32.xlu0 %v999
        %v1001 = vpop.xlane.xlu0 %1000
        %v1002 = vmin.f32 %v985, %v986
        %1003 = vmin.xlane.f32.xlu0 %v1002
        %v1004 = vpop.xlane.xlu0 %1003
        %v1005 = vmin.f32 %v987, %v988
        %1006 = vmin.xlane.f32.xlu0 %v1005
        %v1007 = vpop.xlane.xlu0 %1006
        %v1008 = vmin.f32 %v989, %v990
        %1009 = vmin.xlane.f32.xlu0 %v1008
        %v1010 = vpop.xlane.xlu0 %1009
        %v1011 = vmin.f32 %v991, %v992
        %1012 = vmin.xlane.f32.xlu0 %v1011
        %v1013 = vpop.xlane.xlu0 %1012
        %v1014 = vmin.f32 %v993, %v994
        %1015 = vmin.xlane.f32.xlu0 %v1014
        %v1016 = vpop.xlane.xlu0 %1015
        %v1017 = vmin.f32 %v995, %v996
        %1018 = vmin.xlane.f32.xlu0 %v1017
        %v1019 = vpop.xlane.xlu0 %1018
        %v1020 = vmin.f32 %v997, %v998
        %1021 = vmin.xlane.f32.xlu0 %v1020
        %v1022 = vpop.xlane.xlu0 %1021
        %vm1023 = vcmp.eq.f32.partialorder %v983, %v1001
        %vm1024 = vcmp.eq.f32.partialorder %v984, %v1001
        %vm1025 = vcmp.eq.f32.partialorder %v985, %v1004
        %vm1026 = vcmp.eq.f32.partialorder %v986, %v1004
        %vm1027 = vcmp.eq.f32.partialorder %v987, %v1007
        %vm1028 = vcmp.eq.f32.partialorder %v988, %v1007
        %vm1029 = vcmp.eq.f32.partialorder %v989, %v1010
        %vm1030 = vcmp.eq.f32.partialorder %v990, %v1010
        %vm1031 = vcmp.eq.f32.partialorder %v991, %v1013
        %vm1032 = vcmp.eq.f32.partialorder %v992, %v1013
        %vm1033 = vcmp.eq.f32.partialorder %v993, %v1016
        %vm1034 = vcmp.eq.f32.partialorder %v994, %v1016
        %vm1035 = vcmp.eq.f32.partialorder %v995, %v1019
        %vm1036 = vcmp.eq.f32.partialorder %v996, %v1019
        %vm1037 = vcmp.eq.f32.partialorder %v997, %v1022
        %vm1038 = vcmp.eq.f32.partialorder %v998, %v1022
        %v1039 = vsel %vm1023, %v611, 256
        %v1040 = vsel %vm1024, %v612, 256
        %v1041 = vsel %vm1025, %v611, 256
        %v1042 = vsel %vm1026, %v612, 256
        %v1043 = vsel %vm1027, %v611, 256
        %v1044 = vsel %vm1028, %v612, 256
        %v1045 = vsel %vm1029, %v611, 256
        %v1046 = vsel %vm1030, %v612, 256
        %v1047 = vsel %vm1031, %v611, 256
        %v1048 = vsel %vm1032, %v612, 256
        %v1049 = vsel %vm1033, %v611, 256
        %v1050 = vsel %vm1034, %v612, 256
        %v1051 = vsel %vm1035, %v611, 256
        %v1052 = vsel %vm1036, %v612, 256
        %v1053 = vsel %vm1037, %v611, 256
        %v1054 = vsel %vm1038, %v612, 256
        %vm1055 = vcmp.lt.s32.totalorder %v1039, %v1040
        %v1056 = vsel %vm1055, %v1039, %v1040
        %v1057 = vand.u32 %v1056, 65535
        %v1058 = vshra.s32 %v1056, 16
        %v1059 = vcvt.s32.f32 %v1057
        %v1060 = vcvt.s32.f32 %v1058
        %1061 = vmin.xlane.f32.xlu0 %v1060
        %v1062 = vpop.xlane.xlu0 %1061
        %vm1063 = vcmp.eq.f32.partialorder %v1060, %v1062
        %v1064 = vsel %vm1063, %v1059, inf
        %1065 = vmin.xlane.f32.xlu0 %v1064
        %v1066 = vpop.xlane.xlu0 %1065
        %v1067 = vcvt.f32.s32 %v1066
        %v1068 = vcvt.f32.s32 %v1062
        %v1069 = vshll.u32 %v1068, 16
        %v1070 = vadd.s32 %v1069, %v1067
        %vm1071 = vcmp.lt.s32.totalorder %v1041, %v1042
        %v1072 = vsel %vm1071, %v1041, %v1042
        %v1073 = vand.u32 %v1072, 65535
        %v1074 = vshra.s32 %v1072, 16
        %v1075 = vcvt.s32.f32 %v1073
        %v1076 = vcvt.s32.f32 %v1074
        %1077 = vmin.xlane.f32.xlu0 %v1076
        %v1078 = vpop.xlane.xlu0 %1077
        %vm1079 = vcmp.eq.f32.partialorder %v1076, %v1078
        %v1080 = vsel %vm1079, %v1075, inf
        %1081 = vmin.xlane.f32.xlu0 %v1080
        %v1082 = vpop.xlane.xlu0 %1081
        %v1083 = vcvt.f32.s32 %v1082
        %v1084 = vcvt.f32.s32 %v1078
        %v1085 = vshll.u32 %v1084, 16
        %v1086 = vadd.s32 %v1085, %v1083
        %vm1087 = vcmp.lt.s32.totalorder %v1043, %v1044
        %v1088 = vsel %vm1087, %v1043, %v1044
        %v1089 = vand.u32 %v1088, 65535
        %v1090 = vshra.s32 %v1088, 16
        %v1091 = vcvt.s32.f32 %v1089
        %v1092 = vcvt.s32.f32 %v1090
        %1093 = vmin.xlane.f32.xlu0 %v1092
        %v1094 = vpop.xlane.xlu0 %1093
        %vm1095 = vcmp.eq.f32.partialorder %v1092, %v1094
        %v1096 = vsel %vm1095, %v1091, inf
        %1097 = vmin.xlane.f32.xlu0 %v1096
        %v1098 = vpop.xlane.xlu0 %1097
        %v1099 = vcvt.f32.s32 %v1098
        %v1100 = vcvt.f32.s32 %v1094
        %v1101 = vshll.u32 %v1100, 16
        %v1102 = vadd.s32 %v1101, %v1099
        %vm1103 = vcmp.lt.s32.totalorder %v1045, %v1046
        %v1104 = vsel %vm1103, %v1045, %v1046
        %v1105 = vand.u32 %v1104, 65535
        %v1106 = vshra.s32 %v1104, 16
        %v1107 = vcvt.s32.f32 %v1105
        %v1108 = vcvt.s32.f32 %v1106
        %1109 = vmin.xlane.f32.xlu0 %v1108
        %v1110 = vpop.xlane.xlu0 %1109
        %vm1111 = vcmp.eq.f32.partialorder %v1108, %v1110
        %v1112 = vsel %vm1111, %v1107, inf
        %1113 = vmin.xlane.f32.xlu0 %v1112
        %v1114 = vpop.xlane.xlu0 %1113
        %v1115 = vcvt.f32.s32 %v1114
        %v1116 = vcvt.f32.s32 %v1110
        %v1117 = vshll.u32 %v1116, 16
        %v1118 = vadd.s32 %v1117, %v1115
        %vm1119 = vcmp.lt.s32.totalorder %v1047, %v1048
        %v1120 = vsel %vm1119, %v1047, %v1048
        %v1121 = vand.u32 %v1120, 65535
        %v1122 = vshra.s32 %v1120, 16
        %v1123 = vcvt.s32.f32 %v1121
        %v1124 = vcvt.s32.f32 %v1122
        %1125 = vmin.xlane.f32.xlu0 %v1124
        %v1126 = vpop.xlane.xlu0 %1125
        %vm1127 = vcmp.eq.f32.partialorder %v1124, %v1126
        %v1128 = vsel %vm1127, %v1123, inf
        %1129 = vmin.xlane.f32.xlu0 %v1128
        %v1130 = vpop.xlane.xlu0 %1129
        %v1131 = vcvt.f32.s32 %v1130
        %v1132 = vcvt.f32.s32 %v1126
        %v1133 = vshll.u32 %v1132, 16
        %v1134 = vadd.s32 %v1133, %v1131
        %vm1135 = vcmp.lt.s32.totalorder %v1049, %v1050
        %v1136 = vsel %vm1135, %v1049, %v1050
        %v1137 = vand.u32 %v1136, 65535
        %v1138 = vshra.s32 %v1136, 16
        %v1139 = vcvt.s32.f32 %v1137
        %v1140 = vcvt.s32.f32 %v1138
        %1141 = vmin.xlane.f32.xlu0 %v1140
        %v1142 = vpop.xlane.xlu0 %1141
        %vm1143 = vcmp.eq.f32.partialorder %v1140, %v1142
        %v1144 = vsel %vm1143, %v1139, inf
        %1145 = vmin.xlane.f32.xlu0 %v1144
        %v1146 = vpop.xlane.xlu0 %1145
        %v1147 = vcvt.f32.s32 %v1146
        %v1148 = vcvt.f32.s32 %v1142
        %v1149 = vshll.u32 %v1148, 16
        %v1150 = vadd.s32 %v1149, %v1147
        %vm1151 = vcmp.lt.s32.totalorder %v1051, %v1052
        %v1152 = vsel %vm1151, %v1051, %v1052
        %v1153 = vand.u32 %v1152, 65535
        %v1154 = vshra.s32 %v1152, 16
        %v1155 = vcvt.s32.f32 %v1153
        %v1156 = vcvt.s32.f32 %v1154
        %1157 = vmin.xlane.f32.xlu0 %v1156
        %v1158 = vpop.xlane.xlu0 %1157
        %vm1159 = vcmp.eq.f32.partialorder %v1156, %v1158
        %v1160 = vsel %vm1159, %v1155, inf
        %1161 = vmin.xlane.f32.xlu0 %v1160
        %v1162 = vpop.xlane.xlu0 %1161
        %v1163 = vcvt.f32.s32 %v1162
        %v1164 = vcvt.f32.s32 %v1158
        %v1165 = vshll.u32 %v1164, 16
        %v1166 = vadd.s32 %v1165, %v1163
        %vm1167 = vcmp.lt.s32.totalorder %v1053, %v1054
        %v1168 = vsel %vm1167, %v1053, %v1054
        %v1169 = vand.u32 %v1168, 65535
        %v1170 = vshra.s32 %v1168, 16
        %v1171 = vcvt.s32.f32 %v1169
        %v1172 = vcvt.s32.f32 %v1170
        %1173 = vmin.xlane.f32.xlu0 %v1172
        %v1174 = vpop.xlane.xlu0 %1173
        %vm1175 = vcmp.eq.f32.partialorder %v1172, %v1174
        %v1176 = vsel %vm1175, %v1171, inf
        %1177 = vmin.xlane.f32.xlu0 %v1176
        %v1178 = vpop.xlane.xlu0 %1177
        %v1179 = vcvt.f32.s32 %v1178
        %v1180 = vcvt.f32.s32 %v1174
        %v1181 = vshll.u32 %v1180, 16
        %v1182 = vadd.s32 %v1181, %v1179
        %vm1183 = vcmp.eq.s32.totalorder %v611, %v1070
        %vm1184 = vcmp.eq.s32.totalorder %v612, %v1070
        %vm1185 = vcmp.eq.s32.totalorder %v611, %v1086
        %vm1186 = vcmp.eq.s32.totalorder %v612, %v1086
        %vm1187 = vcmp.eq.s32.totalorder %v611, %v1102
        %vm1188 = vcmp.eq.s32.totalorder %v612, %v1102
        %vm1189 = vcmp.eq.s32.totalorder %v611, %v1118
        %vm1190 = vcmp.eq.s32.totalorder %v612, %v1118
        %vm1191 = vcmp.eq.s32.totalorder %v611, %v1134
        %vm1192 = vcmp.eq.s32.totalorder %v612, %v1134
        %vm1193 = vcmp.eq.s32.totalorder %v611, %v1150
        %vm1194 = vcmp.eq.s32.totalorder %v612, %v1150
        %vm1195 = vcmp.eq.s32.totalorder %v611, %v1166
        %vm1196 = vcmp.eq.s32.totalorder %v612, %v1166
        %vm1197 = vcmp.eq.s32.totalorder %v611, %v1182
        %vm1198 = vcmp.eq.s32.totalorder %v612, %v1182
        %v1199 = vsel %vm1183, 1, 0
        %v1200 = vsel %vm1184, 1, 0
        %v1201 = vsel %vm1185, 1, 0
        %v1202 = vsel %vm1186, 1, 0
        %v1203 = vsel %vm1187, 1, 0
        %v1204 = vsel %vm1188, 1, 0
        %v1205 = vsel %vm1189, 1, 0
        %v1206 = vsel %vm1190, 1, 0
        %v1207 = vsel %vm1191, 1, 0
        %v1208 = vsel %vm1192, 1, 0
        %v1209 = vsel %vm1193, 1, 0
        %v1210 = vsel %vm1194, 1, 0
        %v1211 = vsel %vm1195, 1, 0
        %v1212 = vsel %vm1196, 1, 0
        %v1213 = vsel %vm1197, 1, 0
        %v1214 = vsel %vm1198, 1, 0
        %v1215 = vcvt.s32.f32 %v1199
        %v1216 = vcvt.s32.f32 %v1200
        %v1217 = vcvt.s32.f32 %v1201
        %v1218 = vcvt.s32.f32 %v1202
        %v1219 = vcvt.s32.f32 %v1203
        %v1220 = vcvt.s32.f32 %v1204
        %v1221 = vcvt.s32.f32 %v1205
        %v1222 = vcvt.s32.f32 %v1206
        %v1223 = vcvt.s32.f32 %v1207
        %v1224 = vcvt.s32.f32 %v1208
        %v1225 = vcvt.s32.f32 %v1209
        %v1226 = vcvt.s32.f32 %v1210
        %v1227 = vcvt.s32.f32 %v1211
        %v1228 = vcvt.s32.f32 %v1212
        %v1229 = vcvt.s32.f32 %v1213
        %v1230 = vcvt.s32.f32 %v1214
        %1231 = vmatpush.msra.mxu0 %v326
        %1232 = vmatpush.msra.mxu0 %v325
        %1233 = vmatpush.msra.mxu0 %v324
        %1234 = vmatpush.msra.mxu0 %v323
        %1235 = vmatpush.msra.mxu0 %v322
        %1236 = vmatpush.msra.mxu0 %v321
        %1237 = vmatpush.msra.mxu0 %v320
        %1238 = vmatpush.msra.mxu0 %v319
        %1239 = vmatpush.msra.mxu0 %v318
        %1240 = vmatpush.msra.mxu0 %v317
        %1241 = vmatpush.msra.mxu0 %v316
        %1242 = vmatpush.msra.mxu0 %v315
        %1243 = vmatpush.msra.mxu0 %v314
        %1244 = vmatpush.msra.mxu0 %v313
        %1245 = vmatpush.msra.mxu0 %v312
        %1246 = vmatpush.msra.mxu0 %v311
        %1247 = vmatmul.f32.gmra.mxu0 %v1215
        %v1248 = vpop.f32.mrf.mxu0
        %v1249 = vadd.f32 0.0, %v1248
        %1250 = vmatmul.f32.gmra.mxu0 %v1217
        %v1251 = vpop.f32.mrf.mxu0
        %v1252 = vadd.f32 0.0, %v1251
        %1253 = vmatmul.f32.gmra.mxu0 %v1219
        %v1254 = vpop.f32.mrf.mxu0
        %v1255 = vadd.f32 0.0, %v1254
        %1256 = vmatmul.f32.gmra.mxu0 %v1221
        %v1257 = vpop.f32.mrf.mxu0
        %v1258 = vadd.f32 0.0, %v1257
        %1259 = vmatmul.f32.gmra.mxu0 %v1223
        %v1260 = vpop.f32.mrf.mxu0
        %v1261 = vadd.f32 0.0, %v1260
        %1262 = vmatmul.f32.gmra.mxu0 %v1225
        %v1263 = vpop.f32.mrf.mxu0
        %v1264 = vadd.f32 0.0, %v1263
        %1265 = vmatmul.f32.gmra.mxu0 %v1227
        %v1266 = vpop.f32.mrf.mxu0
        %v1267 = vadd.f32 0.0, %v1266
        %1268 = vmatmul.f32.gmra.mxu0 %v1229
        %v1269 = vpop.f32.mrf.mxu0
        %v1270 = vadd.f32 0.0, %v1269
        %1271 = vdwg.mxu0
        %1272 = vmatpush.msra.mxu0 %v342
        %1273 = vmatpush.msra.mxu0 %v341
        %1274 = vmatpush.msra.mxu0 %v340
        %1275 = vmatpush.msra.mxu0 %v339
        %1276 = vmatpush.msra.mxu0 %v338
        %1277 = vmatpush.msra.mxu0 %v337
        %1278 = vmatpush.msra.mxu0 %v336
        %1279 = vmatpush.msra.mxu0 %v335
        %1280 = vmatpush.msra.mxu0 %v334
        %1281 = vmatpush.msra.mxu0 %v333
        %1282 = vmatpush.msra.mxu0 %v332
        %1283 = vmatpush.msra.mxu0 %v331
        %1284 = vmatpush.msra.mxu0 %v330
        %1285 = vmatpush.msra.mxu0 %v329
        %1286 = vmatpush.msra.mxu0 %v328
        %1287 = vmatpush.msra.mxu0 %v327
        %1288 = vmatmul.f32.gmra.mxu0 %v1216
        %v1289 = vpop.f32.mrf.mxu0
        %v1290 = vadd.f32 %v1249, %v1289
        %1291 = vmatmul.f32.gmra.mxu0 %v1218
        %v1292 = vpop.f32.mrf.mxu0
        %v1293 = vadd.f32 %v1252, %v1292
        %1294 = vmatmul.f32.gmra.mxu0 %v1220
        %v1295 = vpop.f32.mrf.mxu0
        %v1296 = vadd.f32 %v1255, %v1295
        %1297 = vmatmul.f32.gmra.mxu0 %v1222
        %v1298 = vpop.f32.mrf.mxu0
        %v1299 = vadd.f32 %v1258, %v1298
        %1300 = vmatmul.f32.gmra.mxu0 %v1224
        %v1301 = vpop.f32.mrf.mxu0
        %v1302 = vadd.f32 %v1261, %v1301
        %1303 = vmatmul.f32.gmra.mxu0 %v1226
        %v1304 = vpop.f32.mrf.mxu0
        %v1305 = vadd.f32 %v1264, %v1304
        %1306 = vmatmul.f32.gmra.mxu0 %v1228
        %v1307 = vpop.f32.mrf.mxu0
        %v1308 = vadd.f32 %v1267, %v1307
        %1309 = vmatmul.f32.gmra.mxu0 %v1230
        %v1310 = vpop.f32.mrf.mxu0
        %v1311 = vadd.f32 %v1270, %v1310
        %1312 = vdwg.mxu0
        %v1313 = vmax.f32 %v960, %v1290
        %v1314 = vmax.f32 %v963, %v1293
        %v1315 = vmax.f32 %v966, %v1296
        %v1316 = vmax.f32 %v969, %v1299
        %v1317 = vmax.f32 %v972, %v1302
        %v1318 = vmax.f32 %v975, %v1305
        %v1319 = vmax.f32 %v978, %v1308
        %v1320 = vmax.f32 %v981, %v1311
        %v1321 = vsel %vm1183, inf, %v983
        %v1322 = vsel %vm1184, inf, %v984
        %v1323 = vsel %vm1185, inf, %v985
        %v1324 = vsel %vm1186, inf, %v986
        %v1325 = vsel %vm1187, inf, %v987
        %v1326 = vsel %vm1188, inf, %v988
        %v1327 = vsel %vm1189, inf, %v989
        %v1328 = vsel %vm1190, inf, %v990
        %v1329 = vsel %vm1191, inf, %v991
        %v1330 = vsel %vm1192, inf, %v992
        %v1331 = vsel %vm1193, inf, %v993
        %v1332 = vsel %vm1194, inf, %v994
        %v1333 = vsel %vm1195, inf, %v995
        %v1334 = vsel %vm1196, inf, %v996
        %v1335 = vsel %vm1197, inf, %v997
        %v1336 = vsel %vm1198, inf, %v998
        %v1337 = vmin.f32 %v1321, %v1322
        %1338 = vmin.xlane.f32.xlu0 %v1337
        %v1339 = vpop.xlane.xlu0 %1338
        %v1340 = vmin.f32 %v1323, %v1324
        %1341 = vmin.xlane.f32.xlu0 %v1340
        %v1342 = vpop.xlane.xlu0 %1341
        %v1343 = vmin.f32 %v1325, %v1326
        %1344 = vmin.xlane.f32.xlu0 %v1343
        %v1345 = vpop.xlane.xlu0 %1344
        %v1346 = vmin.f32 %v1327, %v1328
        %1347 = vmin.xlane.f32.xlu0 %v1346
        %v1348 = vpop.xlane.xlu0 %1347
        %v1349 = vmin.f32 %v1329, %v1330
        %1350 = vmin.xlane.f32.xlu0 %v1349
        %v1351 = vpop.xlane.xlu0 %1350
        %v1352 = vmin.f32 %v1331, %v1332
        %1353 = vmin.xlane.f32.xlu0 %v1352
        %v1354 = vpop.xlane.xlu0 %1353
        %v1355 = vmin.f32 %v1333, %v1334
        %1356 = vmin.xlane.f32.xlu0 %v1355
        %v1357 = vpop.xlane.xlu0 %1356
        %v1358 = vmin.f32 %v1335, %v1336
        %1359 = vmin.xlane.f32.xlu0 %v1358
        %v1360 = vpop.xlane.xlu0 %1359
        %vm1361 = vcmp.eq.f32.partialorder %v1321, %v1339
        %vm1362 = vcmp.eq.f32.partialorder %v1322, %v1339
        %vm1363 = vcmp.eq.f32.partialorder %v1323, %v1342
        %vm1364 = vcmp.eq.f32.partialorder %v1324, %v1342
        %vm1365 = vcmp.eq.f32.partialorder %v1325, %v1345
        %vm1366 = vcmp.eq.f32.partialorder %v1326, %v1345
        %vm1367 = vcmp.eq.f32.partialorder %v1327, %v1348
        %vm1368 = vcmp.eq.f32.partialorder %v1328, %v1348
        %vm1369 = vcmp.eq.f32.partialorder %v1329, %v1351
        %vm1370 = vcmp.eq.f32.partialorder %v1330, %v1351
        %vm1371 = vcmp.eq.f32.partialorder %v1331, %v1354
        %vm1372 = vcmp.eq.f32.partialorder %v1332, %v1354
        %vm1373 = vcmp.eq.f32.partialorder %v1333, %v1357
        %vm1374 = vcmp.eq.f32.partialorder %v1334, %v1357
        %vm1375 = vcmp.eq.f32.partialorder %v1335, %v1360
        %vm1376 = vcmp.eq.f32.partialorder %v1336, %v1360
        %v1377 = vsel %vm1361, %v611, 256
        %v1378 = vsel %vm1362, %v612, 256
        %v1379 = vsel %vm1363, %v611, 256
        %v1380 = vsel %vm1364, %v612, 256
        %v1381 = vsel %vm1365, %v611, 256
        %v1382 = vsel %vm1366, %v612, 256
        %v1383 = vsel %vm1367, %v611, 256
        %v1384 = vsel %vm1368, %v612, 256
        %v1385 = vsel %vm1369, %v611, 256
        %v1386 = vsel %vm1370, %v612, 256
        %v1387 = vsel %vm1371, %v611, 256
        %v1388 = vsel %vm1372, %v612, 256
        %v1389 = vsel %vm1373, %v611, 256
        %v1390 = vsel %vm1374, %v612, 256
        %v1391 = vsel %vm1375, %v611, 256
        %v1392 = vsel %vm1376, %v612, 256
        %vm1393 = vcmp.lt.s32.totalorder %v1377, %v1378
        %v1394 = vsel %vm1393, %v1377, %v1378
        %v1395 = vand.u32 %v1394, 65535
        %v1396 = vshra.s32 %v1394, 16
        %v1397 = vcvt.s32.f32 %v1395
        %v1398 = vcvt.s32.f32 %v1396
        %1399 = vmin.xlane.f32.xlu0 %v1398
        %v1400 = vpop.xlane.xlu0 %1399
        %vm1401 = vcmp.eq.f32.partialorder %v1398, %v1400
        %v1402 = vsel %vm1401, %v1397, inf
        %1403 = vmin.xlane.f32.xlu0 %v1402
        %v1404 = vpop.xlane.xlu0 %1403
        %v1405 = vcvt.f32.s32 %v1404
        %v1406 = vcvt.f32.s32 %v1400
        %v1407 = vshll.u32 %v1406, 16
        %v1408 = vadd.s32 %v1407, %v1405
        %vm1409 = vcmp.lt.s32.totalorder %v1379, %v1380
        %v1410 = vsel %vm1409, %v1379, %v1380
        %v1411 = vand.u32 %v1410, 65535
        %v1412 = vshra.s32 %v1410, 16
        %v1413 = vcvt.s32.f32 %v1411
        %v1414 = vcvt.s32.f32 %v1412
        %1415 = vmin.xlane.f32.xlu0 %v1414
        %v1416 = vpop.xlane.xlu0 %1415
        %vm1417 = vcmp.eq.f32.partialorder %v1414, %v1416
        %v1418 = vsel %vm1417, %v1413, inf
        %1419 = vmin.xlane.f32.xlu0 %v1418
        %v1420 = vpop.xlane.xlu0 %1419
        %v1421 = vcvt.f32.s32 %v1420
        %v1422 = vcvt.f32.s32 %v1416
        %v1423 = vshll.u32 %v1422, 16
        %v1424 = vadd.s32 %v1423, %v1421
        %vm1425 = vcmp.lt.s32.totalorder %v1381, %v1382
        %v1426 = vsel %vm1425, %v1381, %v1382
        %v1427 = vand.u32 %v1426, 65535
        %v1428 = vshra.s32 %v1426, 16
        %v1429 = vcvt.s32.f32 %v1427
        %v1430 = vcvt.s32.f32 %v1428
        %1431 = vmin.xlane.f32.xlu0 %v1430
        %v1432 = vpop.xlane.xlu0 %1431
        %vm1433 = vcmp.eq.f32.partialorder %v1430, %v1432
        %v1434 = vsel %vm1433, %v1429, inf
        %1435 = vmin.xlane.f32.xlu0 %v1434
        %v1436 = vpop.xlane.xlu0 %1435
        %v1437 = vcvt.f32.s32 %v1436
        %v1438 = vcvt.f32.s32 %v1432
        %v1439 = vshll.u32 %v1438, 16
        %v1440 = vadd.s32 %v1439, %v1437
        %vm1441 = vcmp.lt.s32.totalorder %v1383, %v1384
        %v1442 = vsel %vm1441, %v1383, %v1384
        %v1443 = vand.u32 %v1442, 65535
        %v1444 = vshra.s32 %v1442, 16
        %v1445 = vcvt.s32.f32 %v1443
        %v1446 = vcvt.s32.f32 %v1444
        %1447 = vmin.xlane.f32.xlu0 %v1446
        %v1448 = vpop.xlane.xlu0 %1447
        %vm1449 = vcmp.eq.f32.partialorder %v1446, %v1448
        %v1450 = vsel %vm1449, %v1445, inf
        %1451 = vmin.xlane.f32.xlu0 %v1450
        %v1452 = vpop.xlane.xlu0 %1451
        %v1453 = vcvt.f32.s32 %v1452
        %v1454 = vcvt.f32.s32 %v1448
        %v1455 = vshll.u32 %v1454, 16
        %v1456 = vadd.s32 %v1455, %v1453
        %vm1457 = vcmp.lt.s32.totalorder %v1385, %v1386
        %v1458 = vsel %vm1457, %v1385, %v1386
        %v1459 = vand.u32 %v1458, 65535
        %v1460 = vshra.s32 %v1458, 16
        %v1461 = vcvt.s32.f32 %v1459
        %v1462 = vcvt.s32.f32 %v1460
        %1463 = vmin.xlane.f32.xlu0 %v1462
        %v1464 = vpop.xlane.xlu0 %1463
        %vm1465 = vcmp.eq.f32.partialorder %v1462, %v1464
        %v1466 = vsel %vm1465, %v1461, inf
        %1467 = vmin.xlane.f32.xlu0 %v1466
        %v1468 = vpop.xlane.xlu0 %1467
        %v1469 = vcvt.f32.s32 %v1468
        %v1470 = vcvt.f32.s32 %v1464
        %v1471 = vshll.u32 %v1470, 16
        %v1472 = vadd.s32 %v1471, %v1469
        %vm1473 = vcmp.lt.s32.totalorder %v1387, %v1388
        %v1474 = vsel %vm1473, %v1387, %v1388
        %v1475 = vand.u32 %v1474, 65535
        %v1476 = vshra.s32 %v1474, 16
        %v1477 = vcvt.s32.f32 %v1475
        %v1478 = vcvt.s32.f32 %v1476
        %1479 = vmin.xlane.f32.xlu0 %v1478
        %v1480 = vpop.xlane.xlu0 %1479
        %vm1481 = vcmp.eq.f32.partialorder %v1478, %v1480
        %v1482 = vsel %vm1481, %v1477, inf
        %1483 = vmin.xlane.f32.xlu0 %v1482
        %v1484 = vpop.xlane.xlu0 %1483
        %v1485 = vcvt.f32.s32 %v1484
        %v1486 = vcvt.f32.s32 %v1480
        %v1487 = vshll.u32 %v1486, 16
        %v1488 = vadd.s32 %v1487, %v1485
        %vm1489 = vcmp.lt.s32.totalorder %v1389, %v1390
        %v1490 = vsel %vm1489, %v1389, %v1390
        %v1491 = vand.u32 %v1490, 65535
        %v1492 = vshra.s32 %v1490, 16
        %v1493 = vcvt.s32.f32 %v1491
        %v1494 = vcvt.s32.f32 %v1492
        %1495 = vmin.xlane.f32.xlu0 %v1494
        %v1496 = vpop.xlane.xlu0 %1495
        %vm1497 = vcmp.eq.f32.partialorder %v1494, %v1496
        %v1498 = vsel %vm1497, %v1493, inf
        %1499 = vmin.xlane.f32.xlu0 %v1498
        %v1500 = vpop.xlane.xlu0 %1499
        %v1501 = vcvt.f32.s32 %v1500
        %v1502 = vcvt.f32.s32 %v1496
        %v1503 = vshll.u32 %v1502, 16
        %v1504 = vadd.s32 %v1503, %v1501
        %vm1505 = vcmp.lt.s32.totalorder %v1391, %v1392
        %v1506 = vsel %vm1505, %v1391, %v1392
        %v1507 = vand.u32 %v1506, 65535
        %v1508 = vshra.s32 %v1506, 16
        %v1509 = vcvt.s32.f32 %v1507
        %v1510 = vcvt.s32.f32 %v1508
        %1511 = vmin.xlane.f32.xlu0 %v1510
        %v1512 = vpop.xlane.xlu0 %1511
        %vm1513 = vcmp.eq.f32.partialorder %v1510, %v1512
        %v1514 = vsel %vm1513, %v1509, inf
        %1515 = vmin.xlane.f32.xlu0 %v1514
        %v1516 = vpop.xlane.xlu0 %1515
        %v1517 = vcvt.f32.s32 %v1516
        %v1518 = vcvt.f32.s32 %v1512
        %v1519 = vshll.u32 %v1518, 16
        %v1520 = vadd.s32 %v1519, %v1517
        %vm1521 = vcmp.eq.s32.totalorder %v611, %v1408
        %vm1522 = vcmp.eq.s32.totalorder %v612, %v1408
        %vm1523 = vcmp.eq.s32.totalorder %v611, %v1424
        %vm1524 = vcmp.eq.s32.totalorder %v612, %v1424
        %vm1525 = vcmp.eq.s32.totalorder %v611, %v1440
        %vm1526 = vcmp.eq.s32.totalorder %v612, %v1440
        %vm1527 = vcmp.eq.s32.totalorder %v611, %v1456
        %vm1528 = vcmp.eq.s32.totalorder %v612, %v1456
        %vm1529 = vcmp.eq.s32.totalorder %v611, %v1472
        %vm1530 = vcmp.eq.s32.totalorder %v612, %v1472
        %vm1531 = vcmp.eq.s32.totalorder %v611, %v1488
        %vm1532 = vcmp.eq.s32.totalorder %v612, %v1488
        %vm1533 = vcmp.eq.s32.totalorder %v611, %v1504
        %vm1534 = vcmp.eq.s32.totalorder %v612, %v1504
        %vm1535 = vcmp.eq.s32.totalorder %v611, %v1520
        %vm1536 = vcmp.eq.s32.totalorder %v612, %v1520
        %v1537 = vsel %vm1521, 1, 0
        %v1538 = vsel %vm1522, 1, 0
        %v1539 = vsel %vm1523, 1, 0
        %v1540 = vsel %vm1524, 1, 0
        %v1541 = vsel %vm1525, 1, 0
        %v1542 = vsel %vm1526, 1, 0
        %v1543 = vsel %vm1527, 1, 0
        %v1544 = vsel %vm1528, 1, 0
        %v1545 = vsel %vm1529, 1, 0
        %v1546 = vsel %vm1530, 1, 0
        %v1547 = vsel %vm1531, 1, 0
        %v1548 = vsel %vm1532, 1, 0
        %v1549 = vsel %vm1533, 1, 0
        %v1550 = vsel %vm1534, 1, 0
        %v1551 = vsel %vm1535, 1, 0
        %v1552 = vsel %vm1536, 1, 0
        %v1553 = vcvt.s32.f32 %v1537
        %v1554 = vcvt.s32.f32 %v1538
        %v1555 = vcvt.s32.f32 %v1539
        %v1556 = vcvt.s32.f32 %v1540
        %v1557 = vcvt.s32.f32 %v1541
        %v1558 = vcvt.s32.f32 %v1542
        %v1559 = vcvt.s32.f32 %v1543
        %v1560 = vcvt.s32.f32 %v1544
        %v1561 = vcvt.s32.f32 %v1545
        %v1562 = vcvt.s32.f32 %v1546
        %v1563 = vcvt.s32.f32 %v1547
        %v1564 = vcvt.s32.f32 %v1548
        %v1565 = vcvt.s32.f32 %v1549
        %v1566 = vcvt.s32.f32 %v1550
        %v1567 = vcvt.s32.f32 %v1551
        %v1568 = vcvt.s32.f32 %v1552
        %1569 = vmatpush.msra.mxu0 %v326
        %1570 = vmatpush.msra.mxu0 %v325
        %1571 = vmatpush.msra.mxu0 %v324
        %1572 = vmatpush.msra.mxu0 %v323
        %1573 = vmatpush.msra.mxu0 %v322
        %1574 = vmatpush.msra.mxu0 %v321
        %1575 = vmatpush.msra.mxu0 %v320
        %1576 = vmatpush.msra.mxu0 %v319
        %1577 = vmatpush.msra.mxu0 %v318
        %1578 = vmatpush.msra.mxu0 %v317
        %1579 = vmatpush.msra.mxu0 %v316
        %1580 = vmatpush.msra.mxu0 %v315
        %1581 = vmatpush.msra.mxu0 %v314
        %1582 = vmatpush.msra.mxu0 %v313
        %1583 = vmatpush.msra.mxu0 %v312
        %1584 = vmatpush.msra.mxu0 %v311
        %1585 = vmatmul.f32.gmra.mxu0 %v1553
        %v1586 = vpop.f32.mrf.mxu0
        %v1587 = vadd.f32 0.0, %v1586
        %1588 = vmatmul.f32.gmra.mxu0 %v1555
        %v1589 = vpop.f32.mrf.mxu0
        %v1590 = vadd.f32 0.0, %v1589
        %1591 = vmatmul.f32.gmra.mxu0 %v1557
        %v1592 = vpop.f32.mrf.mxu0
        %v1593 = vadd.f32 0.0, %v1592
        %1594 = vmatmul.f32.gmra.mxu0 %v1559
        %v1595 = vpop.f32.mrf.mxu0
        %v1596 = vadd.f32 0.0, %v1595
        %1597 = vmatmul.f32.gmra.mxu0 %v1561
        %v1598 = vpop.f32.mrf.mxu0
        %v1599 = vadd.f32 0.0, %v1598
        %1600 = vmatmul.f32.gmra.mxu0 %v1563
        %v1601 = vpop.f32.mrf.mxu0
        %v1602 = vadd.f32 0.0, %v1601
        %1603 = vmatmul.f32.gmra.mxu0 %v1565
        %v1604 = vpop.f32.mrf.mxu0
        %v1605 = vadd.f32 0.0, %v1604
        %1606 = vmatmul.f32.gmra.mxu0 %v1567
        %v1607 = vpop.f32.mrf.mxu0
        %v1608 = vadd.f32 0.0, %v1607
        %1609 = vdwg.mxu0
        %1610 = vmatpush.msra.mxu0 %v342
        %1611 = vmatpush.msra.mxu0 %v341
        %1612 = vmatpush.msra.mxu0 %v340
        %1613 = vmatpush.msra.mxu0 %v339
        %1614 = vmatpush.msra.mxu0 %v338
        %1615 = vmatpush.msra.mxu0 %v337
        %1616 = vmatpush.msra.mxu0 %v336
        %1617 = vmatpush.msra.mxu0 %v335
        %1618 = vmatpush.msra.mxu0 %v334
        %1619 = vmatpush.msra.mxu0 %v333
        %1620 = vmatpush.msra.mxu0 %v332
        %1621 = vmatpush.msra.mxu0 %v331
        %1622 = vmatpush.msra.mxu0 %v330
        %1623 = vmatpush.msra.mxu0 %v329
        %1624 = vmatpush.msra.mxu0 %v328
        %1625 = vmatpush.msra.mxu0 %v327
        %1626 = vmatmul.f32.gmra.mxu0 %v1554
        %v1627 = vpop.f32.mrf.mxu0
        %v1628 = vadd.f32 %v1587, %v1627
        %1629 = vmatmul.f32.gmra.mxu0 %v1556
        %v1630 = vpop.f32.mrf.mxu0
        %v1631 = vadd.f32 %v1590, %v1630
        %1632 = vmatmul.f32.gmra.mxu0 %v1558
        %v1633 = vpop.f32.mrf.mxu0
        %v1634 = vadd.f32 %v1593, %v1633
        %1635 = vmatmul.f32.gmra.mxu0 %v1560
        %v1636 = vpop.f32.mrf.mxu0
        %v1637 = vadd.f32 %v1596, %v1636
        %1638 = vmatmul.f32.gmra.mxu0 %v1562
        %v1639 = vpop.f32.mrf.mxu0
        %v1640 = vadd.f32 %v1599, %v1639
        %1641 = vmatmul.f32.gmra.mxu0 %v1564
        %v1642 = vpop.f32.mrf.mxu0
        %v1643 = vadd.f32 %v1602, %v1642
        %1644 = vmatmul.f32.gmra.mxu0 %v1566
        %v1645 = vpop.f32.mrf.mxu0
        %v1646 = vadd.f32 %v1605, %v1645
        %1647 = vmatmul.f32.gmra.mxu0 %v1568
        %v1648 = vpop.f32.mrf.mxu0
        %v1649 = vadd.f32 %v1608, %v1648
        %1650 = vdwg.mxu0
        %v1651 = vmax.f32 %v1313, %v1628
        %v1652 = vmax.f32 %v1314, %v1631
        %v1653 = vmax.f32 %v1315, %v1634
        %v1654 = vmax.f32 %v1316, %v1637
        %v1655 = vmax.f32 %v1317, %v1640
        %v1656 = vmax.f32 %v1318, %v1643
        %v1657 = vmax.f32 %v1319, %v1646
        %v1658 = vmax.f32 %v1320, %v1649
        %v1659 = vsel %vm1521, inf, %v1321
        %v1660 = vsel %vm1522, inf, %v1322
        %v1661 = vsel %vm1523, inf, %v1323
        %v1662 = vsel %vm1524, inf, %v1324
        %v1663 = vsel %vm1525, inf, %v1325
        %v1664 = vsel %vm1526, inf, %v1326
        %v1665 = vsel %vm1527, inf, %v1327
        %v1666 = vsel %vm1528, inf, %v1328
        %v1667 = vsel %vm1529, inf, %v1329
        %v1668 = vsel %vm1530, inf, %v1330
        %v1669 = vsel %vm1531, inf, %v1331
        %v1670 = vsel %vm1532, inf, %v1332
        %v1671 = vsel %vm1533, inf, %v1333
        %v1672 = vsel %vm1534, inf, %v1334
        %v1673 = vsel %vm1535, inf, %v1335
        %v1674 = vsel %vm1536, inf, %v1336
        %v1675 = vmin.f32 %v1659, %v1660
        %1676 = vmin.xlane.f32.xlu0 %v1675
        %v1677 = vpop.xlane.xlu0 %1676
        %v1678 = vmin.f32 %v1661, %v1662
        %1679 = vmin.xlane.f32.xlu0 %v1678
        %v1680 = vpop.xlane.xlu0 %1679
        %v1681 = vmin.f32 %v1663, %v1664
        %1682 = vmin.xlane.f32.xlu0 %v1681
        %v1683 = vpop.xlane.xlu0 %1682
        %v1684 = vmin.f32 %v1665, %v1666
        %1685 = vmin.xlane.f32.xlu0 %v1684
        %v1686 = vpop.xlane.xlu0 %1685
        %v1687 = vmin.f32 %v1667, %v1668
        %1688 = vmin.xlane.f32.xlu0 %v1687
        %v1689 = vpop.xlane.xlu0 %1688
        %v1690 = vmin.f32 %v1669, %v1670
        %1691 = vmin.xlane.f32.xlu0 %v1690
        %v1692 = vpop.xlane.xlu0 %1691
        %v1693 = vmin.f32 %v1671, %v1672
        %1694 = vmin.xlane.f32.xlu0 %v1693
        %v1695 = vpop.xlane.xlu0 %1694
        %v1696 = vmin.f32 %v1673, %v1674
        %1697 = vmin.xlane.f32.xlu0 %v1696
        %v1698 = vpop.xlane.xlu0 %1697
        %vm1699 = vcmp.eq.f32.partialorder %v1659, %v1677
        %vm1700 = vcmp.eq.f32.partialorder %v1660, %v1677
        %vm1701 = vcmp.eq.f32.partialorder %v1661, %v1680
        %vm1702 = vcmp.eq.f32.partialorder %v1662, %v1680
        %vm1703 = vcmp.eq.f32.partialorder %v1663, %v1683
        %vm1704 = vcmp.eq.f32.partialorder %v1664, %v1683
        %vm1705 = vcmp.eq.f32.partialorder %v1665, %v1686
        %vm1706 = vcmp.eq.f32.partialorder %v1666, %v1686
        %vm1707 = vcmp.eq.f32.partialorder %v1667, %v1689
        %vm1708 = vcmp.eq.f32.partialorder %v1668, %v1689
        %vm1709 = vcmp.eq.f32.partialorder %v1669, %v1692
        %vm1710 = vcmp.eq.f32.partialorder %v1670, %v1692
        %vm1711 = vcmp.eq.f32.partialorder %v1671, %v1695
        %vm1712 = vcmp.eq.f32.partialorder %v1672, %v1695
        %vm1713 = vcmp.eq.f32.partialorder %v1673, %v1698
        %vm1714 = vcmp.eq.f32.partialorder %v1674, %v1698
        %v1715 = vsel %vm1699, %v611, 256
        %v1716 = vsel %vm1700, %v612, 256
        %v1717 = vsel %vm1701, %v611, 256
        %v1718 = vsel %vm1702, %v612, 256
        %v1719 = vsel %vm1703, %v611, 256
        %v1720 = vsel %vm1704, %v612, 256
        %v1721 = vsel %vm1705, %v611, 256
        %v1722 = vsel %vm1706, %v612, 256
        %v1723 = vsel %vm1707, %v611, 256
        %v1724 = vsel %vm1708, %v612, 256
        %v1725 = vsel %vm1709, %v611, 256
        %v1726 = vsel %vm1710, %v612, 256
        %v1727 = vsel %vm1711, %v611, 256
        %v1728 = vsel %vm1712, %v612, 256
        %v1729 = vsel %vm1713, %v611, 256
        %v1730 = vsel %vm1714, %v612, 256
        %vm1731 = vcmp.lt.s32.totalorder %v1715, %v1716
        %v1732 = vsel %vm1731, %v1715, %v1716
        %v1733 = vand.u32 %v1732, 65535
        %v1734 = vshra.s32 %v1732, 16
        %v1735 = vcvt.s32.f32 %v1733
        %v1736 = vcvt.s32.f32 %v1734
        %1737 = vmin.xlane.f32.xlu0 %v1736
        %v1738 = vpop.xlane.xlu0 %1737
        %vm1739 = vcmp.eq.f32.partialorder %v1736, %v1738
        %v1740 = vsel %vm1739, %v1735, inf
        %1741 = vmin.xlane.f32.xlu0 %v1740
        %v1742 = vpop.xlane.xlu0 %1741
        %v1743 = vcvt.f32.s32 %v1742
        %v1744 = vcvt.f32.s32 %v1738
        %v1745 = vshll.u32 %v1744, 16
        %v1746 = vadd.s32 %v1745, %v1743
        %vm1747 = vcmp.lt.s32.totalorder %v1717, %v1718
        %v1748 = vsel %vm1747, %v1717, %v1718
        %v1749 = vand.u32 %v1748, 65535
        %v1750 = vshra.s32 %v1748, 16
        %v1751 = vcvt.s32.f32 %v1749
        %v1752 = vcvt.s32.f32 %v1750
        %1753 = vmin.xlane.f32.xlu0 %v1752
        %v1754 = vpop.xlane.xlu0 %1753
        %vm1755 = vcmp.eq.f32.partialorder %v1752, %v1754
        %v1756 = vsel %vm1755, %v1751, inf
        %1757 = vmin.xlane.f32.xlu0 %v1756
        %v1758 = vpop.xlane.xlu0 %1757
        %v1759 = vcvt.f32.s32 %v1758
        %v1760 = vcvt.f32.s32 %v1754
        %v1761 = vshll.u32 %v1760, 16
        %v1762 = vadd.s32 %v1761, %v1759
        %vm1763 = vcmp.lt.s32.totalorder %v1719, %v1720
        %v1764 = vsel %vm1763, %v1719, %v1720
        %v1765 = vand.u32 %v1764, 65535
        %v1766 = vshra.s32 %v1764, 16
        %v1767 = vcvt.s32.f32 %v1765
        %v1768 = vcvt.s32.f32 %v1766
        %1769 = vmin.xlane.f32.xlu0 %v1768
        %v1770 = vpop.xlane.xlu0 %1769
        %vm1771 = vcmp.eq.f32.partialorder %v1768, %v1770
        %v1772 = vsel %vm1771, %v1767, inf
        %1773 = vmin.xlane.f32.xlu0 %v1772
        %v1774 = vpop.xlane.xlu0 %1773
        %v1775 = vcvt.f32.s32 %v1774
        %v1776 = vcvt.f32.s32 %v1770
        %v1777 = vshll.u32 %v1776, 16
        %v1778 = vadd.s32 %v1777, %v1775
        %vm1779 = vcmp.lt.s32.totalorder %v1721, %v1722
        %v1780 = vsel %vm1779, %v1721, %v1722
        %v1781 = vand.u32 %v1780, 65535
        %v1782 = vshra.s32 %v1780, 16
        %v1783 = vcvt.s32.f32 %v1781
        %v1784 = vcvt.s32.f32 %v1782
        %1785 = vmin.xlane.f32.xlu0 %v1784
        %v1786 = vpop.xlane.xlu0 %1785
        %vm1787 = vcmp.eq.f32.partialorder %v1784, %v1786
        %v1788 = vsel %vm1787, %v1783, inf
        %1789 = vmin.xlane.f32.xlu0 %v1788
        %v1790 = vpop.xlane.xlu0 %1789
        %v1791 = vcvt.f32.s32 %v1790
        %v1792 = vcvt.f32.s32 %v1786
        %v1793 = vshll.u32 %v1792, 16
        %v1794 = vadd.s32 %v1793, %v1791
        %vm1795 = vcmp.lt.s32.totalorder %v1723, %v1724
        %v1796 = vsel %vm1795, %v1723, %v1724
        %v1797 = vand.u32 %v1796, 65535
        %v1798 = vshra.s32 %v1796, 16
        %v1799 = vcvt.s32.f32 %v1797
        %v1800 = vcvt.s32.f32 %v1798
        %1801 = vmin.xlane.f32.xlu0 %v1800
        %v1802 = vpop.xlane.xlu0 %1801
        %vm1803 = vcmp.eq.f32.partialorder %v1800, %v1802
        %v1804 = vsel %vm1803, %v1799, inf
        %1805 = vmin.xlane.f32.xlu0 %v1804
        %v1806 = vpop.xlane.xlu0 %1805
        %v1807 = vcvt.f32.s32 %v1806
        %v1808 = vcvt.f32.s32 %v1802
        %v1809 = vshll.u32 %v1808, 16
        %v1810 = vadd.s32 %v1809, %v1807
        %vm1811 = vcmp.lt.s32.totalorder %v1725, %v1726
        %v1812 = vsel %vm1811, %v1725, %v1726
        %v1813 = vand.u32 %v1812, 65535
        %v1814 = vshra.s32 %v1812, 16
        %v1815 = vcvt.s32.f32 %v1813
        %v1816 = vcvt.s32.f32 %v1814
        %1817 = vmin.xlane.f32.xlu0 %v1816
        %v1818 = vpop.xlane.xlu0 %1817
        %vm1819 = vcmp.eq.f32.partialorder %v1816, %v1818
        %v1820 = vsel %vm1819, %v1815, inf
        %1821 = vmin.xlane.f32.xlu0 %v1820
        %v1822 = vpop.xlane.xlu0 %1821
        %v1823 = vcvt.f32.s32 %v1822
        %v1824 = vcvt.f32.s32 %v1818
        %v1825 = vshll.u32 %v1824, 16
        %v1826 = vadd.s32 %v1825, %v1823
        %vm1827 = vcmp.lt.s32.totalorder %v1727, %v1728
        %v1828 = vsel %vm1827, %v1727, %v1728
        %v1829 = vand.u32 %v1828, 65535
        %v1830 = vshra.s32 %v1828, 16
        %v1831 = vcvt.s32.f32 %v1829
        %v1832 = vcvt.s32.f32 %v1830
        %1833 = vmin.xlane.f32.xlu0 %v1832
        %v1834 = vpop.xlane.xlu0 %1833
        %vm1835 = vcmp.eq.f32.partialorder %v1832, %v1834
        %v1836 = vsel %vm1835, %v1831, inf
        %1837 = vmin.xlane.f32.xlu0 %v1836
        %v1838 = vpop.xlane.xlu0 %1837
        %v1839 = vcvt.f32.s32 %v1838
        %v1840 = vcvt.f32.s32 %v1834
        %v1841 = vshll.u32 %v1840, 16
        %v1842 = vadd.s32 %v1841, %v1839
        %vm1843 = vcmp.lt.s32.totalorder %v1729, %v1730
        %v1844 = vsel %vm1843, %v1729, %v1730
        %v1845 = vand.u32 %v1844, 65535
        %v1846 = vshra.s32 %v1844, 16
        %v1847 = vcvt.s32.f32 %v1845
        %v1848 = vcvt.s32.f32 %v1846
        %1849 = vmin.xlane.f32.xlu0 %v1848
        %v1850 = vpop.xlane.xlu0 %1849
        %vm1851 = vcmp.eq.f32.partialorder %v1848, %v1850
        %v1852 = vsel %vm1851, %v1847, inf
        %1853 = vmin.xlane.f32.xlu0 %v1852
        %v1854 = vpop.xlane.xlu0 %1853
        %v1855 = vcvt.f32.s32 %v1854
        %v1856 = vcvt.f32.s32 %v1850
        %v1857 = vshll.u32 %v1856, 16
        %v1858 = vadd.s32 %v1857, %v1855
        %vm1859 = vcmp.eq.s32.totalorder %v611, %v1746
        %vm1860 = vcmp.eq.s32.totalorder %v612, %v1746
        %vm1861 = vcmp.eq.s32.totalorder %v611, %v1762
        %vm1862 = vcmp.eq.s32.totalorder %v612, %v1762
        %vm1863 = vcmp.eq.s32.totalorder %v611, %v1778
        %vm1864 = vcmp.eq.s32.totalorder %v612, %v1778
        %vm1865 = vcmp.eq.s32.totalorder %v611, %v1794
        %vm1866 = vcmp.eq.s32.totalorder %v612, %v1794
        %vm1867 = vcmp.eq.s32.totalorder %v611, %v1810
        %vm1868 = vcmp.eq.s32.totalorder %v612, %v1810
        %vm1869 = vcmp.eq.s32.totalorder %v611, %v1826
        %vm1870 = vcmp.eq.s32.totalorder %v612, %v1826
        %vm1871 = vcmp.eq.s32.totalorder %v611, %v1842
        %vm1872 = vcmp.eq.s32.totalorder %v612, %v1842
        %vm1873 = vcmp.eq.s32.totalorder %v611, %v1858
        %vm1874 = vcmp.eq.s32.totalorder %v612, %v1858
        %v1875 = vsel %vm1859, 1, 0
        %v1876 = vsel %vm1860, 1, 0
        %v1877 = vsel %vm1861, 1, 0
        %v1878 = vsel %vm1862, 1, 0
        %v1879 = vsel %vm1863, 1, 0
        %v1880 = vsel %vm1864, 1, 0
        %v1881 = vsel %vm1865, 1, 0
        %v1882 = vsel %vm1866, 1, 0
        %v1883 = vsel %vm1867, 1, 0
        %v1884 = vsel %vm1868, 1, 0
        %v1885 = vsel %vm1869, 1, 0
        %v1886 = vsel %vm1870, 1, 0
        %v1887 = vsel %vm1871, 1, 0
        %v1888 = vsel %vm1872, 1, 0
        %v1889 = vsel %vm1873, 1, 0
        %v1890 = vsel %vm1874, 1, 0
        %v1891 = vcvt.s32.f32 %v1875
        %v1892 = vcvt.s32.f32 %v1876
        %v1893 = vcvt.s32.f32 %v1877
        %v1894 = vcvt.s32.f32 %v1878
        %v1895 = vcvt.s32.f32 %v1879
        %v1896 = vcvt.s32.f32 %v1880
        %v1897 = vcvt.s32.f32 %v1881
        %v1898 = vcvt.s32.f32 %v1882
        %v1899 = vcvt.s32.f32 %v1883
        %v1900 = vcvt.s32.f32 %v1884
        %v1901 = vcvt.s32.f32 %v1885
        %v1902 = vcvt.s32.f32 %v1886
        %v1903 = vcvt.s32.f32 %v1887
        %v1904 = vcvt.s32.f32 %v1888
        %v1905 = vcvt.s32.f32 %v1889
        %v1906 = vcvt.s32.f32 %v1890
        %1907 = vmatpush.msra.mxu0 %v326
        %1908 = vmatpush.msra.mxu0 %v325
        %1909 = vmatpush.msra.mxu0 %v324
        %1910 = vmatpush.msra.mxu0 %v323
        %1911 = vmatpush.msra.mxu0 %v322
        %1912 = vmatpush.msra.mxu0 %v321
        %1913 = vmatpush.msra.mxu0 %v320
        %1914 = vmatpush.msra.mxu0 %v319
        %1915 = vmatpush.msra.mxu0 %v318
        %1916 = vmatpush.msra.mxu0 %v317
        %1917 = vmatpush.msra.mxu0 %v316
        %1918 = vmatpush.msra.mxu0 %v315
        %1919 = vmatpush.msra.mxu0 %v314
        %1920 = vmatpush.msra.mxu0 %v313
        %1921 = vmatpush.msra.mxu0 %v312
        %1922 = vmatpush.msra.mxu0 %v311
        %1923 = vmatmul.f32.gmra.mxu0 %v1891
        %v1924 = vpop.f32.mrf.mxu0
        %v1925 = vadd.f32 0.0, %v1924
        %1926 = vmatmul.f32.gmra.mxu0 %v1893
        %v1927 = vpop.f32.mrf.mxu0
        %v1928 = vadd.f32 0.0, %v1927
        %1929 = vmatmul.f32.gmra.mxu0 %v1895
        %v1930 = vpop.f32.mrf.mxu0
        %v1931 = vadd.f32 0.0, %v1930
        %1932 = vmatmul.f32.gmra.mxu0 %v1897
        %v1933 = vpop.f32.mrf.mxu0
        %v1934 = vadd.f32 0.0, %v1933
        %1935 = vmatmul.f32.gmra.mxu0 %v1899
        %v1936 = vpop.f32.mrf.mxu0
        %v1937 = vadd.f32 0.0, %v1936
        %1938 = vmatmul.f32.gmra.mxu0 %v1901
        %v1939 = vpop.f32.mrf.mxu0
        %v1940 = vadd.f32 0.0, %v1939
        %1941 = vmatmul.f32.gmra.mxu0 %v1903
        %v1942 = vpop.f32.mrf.mxu0
        %v1943 = vadd.f32 0.0, %v1942
        %1944 = vmatmul.f32.gmra.mxu0 %v1905
        %v1945 = vpop.f32.mrf.mxu0
        %v1946 = vadd.f32 0.0, %v1945
        %1947 = vdwg.mxu0
        %1948 = vmatpush.msra.mxu0 %v342
        %1949 = vmatpush.msra.mxu0 %v341
        %1950 = vmatpush.msra.mxu0 %v340
        %1951 = vmatpush.msra.mxu0 %v339
        %1952 = vmatpush.msra.mxu0 %v338
        %1953 = vmatpush.msra.mxu0 %v337
        %1954 = vmatpush.msra.mxu0 %v336
        %1955 = vmatpush.msra.mxu0 %v335
        %1956 = vmatpush.msra.mxu0 %v334
        %1957 = vmatpush.msra.mxu0 %v333
        %1958 = vmatpush.msra.mxu0 %v332
        %1959 = vmatpush.msra.mxu0 %v331
        %1960 = vmatpush.msra.mxu0 %v330
        %1961 = vmatpush.msra.mxu0 %v329
        %1962 = vmatpush.msra.mxu0 %v328
        %1963 = vmatpush.msra.mxu0 %v327
        %1964 = vmatmul.f32.gmra.mxu0 %v1892
        %v1965 = vpop.f32.mrf.mxu0
        %v1966 = vadd.f32 %v1925, %v1965
        %1967 = vmatmul.f32.gmra.mxu0 %v1894
        %v1968 = vpop.f32.mrf.mxu0
        %v1969 = vadd.f32 %v1928, %v1968
        %1970 = vmatmul.f32.gmra.mxu0 %v1896
        %v1971 = vpop.f32.mrf.mxu0
        %v1972 = vadd.f32 %v1931, %v1971
        %1973 = vmatmul.f32.gmra.mxu0 %v1898
        %v1974 = vpop.f32.mrf.mxu0
        %v1975 = vadd.f32 %v1934, %v1974
        %1976 = vmatmul.f32.gmra.mxu0 %v1900
        %v1977 = vpop.f32.mrf.mxu0
        %v1978 = vadd.f32 %v1937, %v1977
        %1979 = vmatmul.f32.gmra.mxu0 %v1902
        %v1980 = vpop.f32.mrf.mxu0
        %v1981 = vadd.f32 %v1940, %v1980
        %1982 = vmatmul.f32.gmra.mxu0 %v1904
        %v1983 = vpop.f32.mrf.mxu0
        %v1984 = vadd.f32 %v1943, %v1983
        %1985 = vmatmul.f32.gmra.mxu0 %v1906
        %v1986 = vpop.f32.mrf.mxu0
        %v1987 = vadd.f32 %v1946, %v1986
        %1988 = vdwg.mxu0
        %v1989 = vmax.f32 %v1651, %v1966
        %v1990 = vmax.f32 %v1652, %v1969
        %v1991 = vmax.f32 %v1653, %v1972
        %v1992 = vmax.f32 %v1654, %v1975
        %v1993 = vmax.f32 %v1655, %v1978
        %v1994 = vmax.f32 %v1656, %v1981
        %v1995 = vmax.f32 %v1657, %v1984
        %v1996 = vmax.f32 %v1658, %v1987
        %1997 = vst [vmem:[%s271] sm:$0xff] %v1989
        %1998 = vst [vmem:[%s271 + $0x8] sm:$0xff] %v1990
        %1999 = vst [vmem:[%s271 + $0x10] sm:$0xff] %v1991
        %2000 = vst [vmem:[%s271 + $0x18] sm:$0xff] %v1992
        %2001 = vst [vmem:[%s271 + $0x20] sm:$0xff] %v1993
        %2002 = vst [vmem:[%s271 + $0x28] sm:$0xff] %v1994
        %2003 = vst [vmem:[%s271 + $0x30] sm:$0xff] %v1995
        %2004 = vst [vmem:[%s271 + $0x38] sm:$0xff] %v1996
        %s2005 = sand.u32 %s147, 1
        %s2006 = scalar_lea.sflag [#allocation4], %s2005
        %s2007 = sand.u32 %s147, 1
        %s2008 = smul.addr %s2007, 64
        %s2009 = scalar_lea.vmem [#allocation5], %s2008
        // Predicated region
        $region41: #{tpu_custom_call.1} parent=35 // pred_check
          %p2010 = pneg %p157
        $region42: #{tpu_custom_call.1} parent=35 // pred_check_branch
          %2012 = sbr.rel (%p2010) target = $region44
        $region43: #{tpu_custom_call.1} parent=35 // pred_region
          %s2013 = smul.u32 8, %s24
          %2015 = vsyncadd %s2006, 0
          %s2016 = smul.addr %s23, 8
          %s2017 = sadd.s32 %s2013, %s2016
          %s2018 = smul.addr %s2017, 8
          %s2019 = scalar_lea.hbm %s4, %s2018
          %s2020 = sshll.u32 %s2009, 4
          %s2021 = int_to_ptr.vmem [resolvable:$true] %s2020
          %s2022 = sshll.u32 %s2019, 4
          %s2023 = int_to_ptr.hbm [resolvable:$true] %s2022
          %2028 = dma.vmem_to_hbm [thread:$0]  %s2021, 1024, %s2023, %s2006, 128, 128, 8
        $region44: #{tpu_custom_call.1} parent=35 // pred_fallthru
          _
      $region36: #{tpu_custom_call.1} parent=5 // pred_fallthru
        _
      %p2029 = scmp.le.s32.totalorder 2, %s14
      // Predicated region
      $region45: #{tpu_custom_call.1} parent=5 // pred_check
        %p2030 = pneg %p2029
      $region46: #{tpu_custom_call.1} parent=5 // pred_check_branch
        %2032 = sbr.rel (%p2030) target = $region48
      $region47: #{tpu_custom_call.1} parent=5 // pred_region
        %s2033 = ssub.s32 %s14, 2
        // Predicated region
        $region49: #{tpu_custom_call.1} parent=47 // pred_check
          %p2034 = pneg %p163
        $region50: #{tpu_custom_call.1} parent=47 // pred_check_branch
          %2036 = sbr.rel (%p2034) target = $region52
        $region51: #{tpu_custom_call.1} parent=47 // pred_region
          %s2037 = sand.u32 %s148, 1
          %s2038 = scalar_lea.sflag [#allocation4], %s2037
          %s2039 = sand.u32 %s148, 1
          %s2040 = smul.addr %s2039, 64
          %s2041 = scalar_lea.vmem [#allocation5], %s2040
          %2043 = dma.done %s2038, 1024
        $region52: #{tpu_custom_call.1} parent=47 // pred_fallthru
          _
      $region48: #{tpu_custom_call.1} parent=5 // pred_fallthru
        _
    $region6: #{tpu_custom_call.1} parent=1 // loop_footer
      %s18 = sadd.s32 1, %s14
    $region7: #{tpu_custom_call.1} parent=1 // loop_footer_branch
      %13 = sbr.rel target = $region3
    $region8: #{tpu_custom_call.1} parent=1 // loop_exit
      _
    %2044 = vsyncpa [#allocation3], 1
    %s2045 = scalar_lea.sflag [#allocation3], 1
    %2046 = vsyncpa %s2045, 1
    %2047 = vsyncpa [#allocation4], 1
    %s2048 = scalar_lea.sflag [#allocation4], 1
    %2049 = vsyncpa %s2048, 1

</llo_original>
